<compile_context>
chip_gen: v6e
topology: v6e:2x2x1
jax: 0.10.0
libtpu: 0.0.40
codegen_flags: <defaults>
</compile_context>

<pallas_src>
import jax
import jax.numpy as jnp
from jax.experimental import pallas as pl
from jax.experimental.pallas import tpu as pltpu

HIDDEN = (1024, 512, 256, 64, 1)
TILE_B_MAX = 1024        # big tile amortizes per-grid-step overhead; ~10-12 MiB VMEM
MIN_B_FOR_SPLIT = 512    # above this, force >=2 grid steps so v7x megacore shards batch


def _round_up(a, m):
    return ((a + m - 1) // m) * m


def _choose_tiling(batch):
    """Balanced batch tiles: minimal padding, >=2 tiles for large batches."""
    n_tiles = pl.cdiv(batch, TILE_B_MAX)
    if batch >= MIN_B_FOR_SPLIT and n_tiles < 2:
        n_tiles = 2                                   # keep both v7x TensorCores busy
    tb = _round_up(pl.cdiv(batch, n_tiles), 8)        # sublane-aligned tile
    return tb, n_tiles * tb


def _mlp_kernel(x_ref,
                w1_ref, b1_ref,
                w2_ref, b2_ref,
                w3_ref, b3_ref,
                w4_ref, b4_ref,
                w5t_ref, b5_ref,
                o_ref):
    """Whole MLP forward for one batch tile; weights resident in VMEM."""

    def dense_relu(h, w_ref, b_ref):
        # bf16 x bf16 MXU matmul, f32 accumulation; bias-add + ReLU in bf16
        # (halves VALU work on v6e/v7x and halves activation VMEM traffic).
        acc = jnp.dot(h, w_ref[...], preferred_element_type=jnp.float32)
        return jnp.maximum(acc.astype(jnp.bfloat16) + b_ref[...], 0)

    h = x_ref[...].astype(jnp.bfloat16)   # single cast at entry, no f32 round-trip
    h = dense_relu(h, w1_ref, b1_ref)     # Linear(D, 1024) + ReLU   (Dropout(0.2) -> id)
    h = dense_relu(h, w2_ref, b2_ref)     # Linear(1024, 512) + ReLU (Dropout(0.2) -> id)
    h = dense_relu(h, w3_ref, b3_ref)     # Linear(512, 256) + ReLU  (Dropout(0.1) -> id)
    h = dense_relu(h, w4_ref, b4_ref)     # Linear(256, 64) + ReLU

    # Linear(64, 1) as a VPU/XLU reduction; write the narrow [tb, 1] column
    # directly (no lane-broadcast -> no 128x HBM write amplification).
    w5 = w5t_ref[...].astype(jnp.float32)                               # [1, 64]
    out = jnp.sum(h.astype(jnp.float32) * w5, axis=-1, keepdims=True)   # [tb, 1]
    o_ref[...] = (out + b5_ref[...].astype(jnp.float32)).astype(o_ref.dtype)


@jax.jit
def logistic_map_nn_forward(x, params):
    """x: [B, D] float32; params: list of (W [in,out] bf16, b [1,out] bf16)."""
    B, D = x.shape
    tb, B_pad = _choose_tiling(B)
    if B_pad != B:
        # Zero-padded rows pick up bias terms but are sliced off below.
        x = jnp.pad(x, ((0, B_pad - B), (0, 0)))

    (w1, b1), (w2, b2), (w3, b3), (w4, b4), (w5, b5) = params
    w5t = w5.reshape(1, HIDDEN[3])          # [64,1] -> [1,64] for the VPU reduction
    flat = [w1, b1, w2, b2, w3, b3, w4, b4, w5t, b5]

    dims = (D,) + HIDDEN
    flops = 2 * B_pad * sum(dims[i] * dims[i + 1] for i in range(len(HIDDEN)))
    bytes_accessed = (x.size * x.dtype.itemsize
                      + sum(a.size * a.dtype.itemsize for a in flat)
                      + B_pad * 4)
    cost = pl.CostEstimate(flops=flops, transcendentals=0,
                           bytes_accessed=bytes_accessed)

    # Constant index_map -> each weight/bias is DMA'd once and stays resident.
    weight_specs = [pl.BlockSpec(a.shape, lambda i: (0, 0)) for a in flat]

    out = pl.pallas_call(
        _mlp_kernel,
        out_shape=jax.ShapeDtypeStruct((B_pad, 1), jnp.float32),
        grid_spec=pltpu.PrefetchScalarGridSpec(
            num_scalar_prefetch=0,
            grid=(B_pad // tb,),
            in_specs=[pl.BlockSpec((tb, D), lambda i: (i, 0))] + weight_specs,
            out_specs=pl.BlockSpec((tb, 1), lambda i: (i, 0)),
        ),
        compiler_params=pltpu.CompilerParams(
            dimension_semantics=("parallel",),   # megacore batch sharding on v7x
            vmem_limit_bytes=32 << 20,           # actual need ~10-12 MiB at tb=1024
        ),
        cost_estimate=cost,
    )(x, *flat)

    return out[:B]


def init_params(key, input_dim):
    """PyTorch-style init U(-1/sqrt(fan_in), 1/sqrt(fan_in)); params stored bf16."""
    dims = (input_dim,) + HIDDEN
    params = []
    for i in range(len(HIDDEN)):
        fan_in, fan_out = dims[i], dims[i + 1]
        key, kw, kb = jax.random.split(key, 3)
        bound = 1.0 / float(fan_in) ** 0.5
        # Stored as [in, out] (transpose of torch's [out, in]) for x @ W.
        w = jax.random.uniform(kw, (fan_in, fan_out), jnp.float32, -bound, bound)
        b = jax.random.uniform(kb, (1, fan_out), jnp.float32, -bound, bound)
        params.append((w.astype(jnp.bfloat16), b.astype(jnp.bfloat16)))
    return params


def reference_forward(x, params):
    """Pure-JAX reference mirroring the kernel's bf16-weight/activation, f32-acc math."""
    h = x.astype(jnp.bfloat16)
    for w, b in params[:-1]:
        acc = jnp.dot(h, w, preferred_element_type=jnp.float32)
        h = jnp.maximum(acc.astype(jnp.bfloat16) + b, 0)
    w5, b5 = params[-1]
    return (jnp.dot(h.astype(jnp.float32), w5.astype(jnp.float32))
            + b5.astype(jnp.float32))


if __name__ == "__main__":
    key = jax.random.PRNGKey(0)
    k_x, k_p = jax.random.split(key)

    B, D = 8, 32  # small batch, input_dim = 32
    x = jax.random.uniform(k_x, (B, D), jnp.float32)  # logistic-map states in [0, 1)
    params = init_params(k_p, D)

    out = jax.block_until_ready(logistic_map_nn_forward(x, params))

    ref = reference_forward(x, params)
    assert out.shape == (B, 1), out.shape
    max_err = jnp.max(jnp.abs(out - ref))
    assert jnp.allclose(out, ref, atol=2e-2, rtol=2e-2), f"max err {max_err}"

    print("KERNEL_OK")
</pallas_src>

<mosaic_0001>
module attributes {stable_mosaic.version = 11 : i64} {
  func.func @_mlp_kernel(%arg0: i32, %arg1: memref<8x32xf32, #tpu.memory_space<vmem>>, %arg2: memref<32x1024xbf16, #tpu.memory_space<vmem>>, %arg3: memref<1x1024xbf16, #tpu.memory_space<vmem>>, %arg4: memref<1024x512xbf16, #tpu.memory_space<vmem>>, %arg5: memref<1x512xbf16, #tpu.memory_space<vmem>>, %arg6: memref<512x256xbf16, #tpu.memory_space<vmem>>, %arg7: memref<1x256xbf16, #tpu.memory_space<vmem>>, %arg8: memref<256x64xbf16, #tpu.memory_space<vmem>>, %arg9: memref<1x64xbf16, #tpu.memory_space<vmem>>, %arg10: memref<1x64xbf16, #tpu.memory_space<vmem>>, %arg11: memref<1x1xbf16, #tpu.memory_space<vmem>>, %arg12: memref<8x1xf32, #tpu.memory_space<vmem>>) attributes {dimension_semantics = [#tpu.dimension_semantics<parallel>], iteration_bounds = array<i64: 1>, scalar_prefetch = 0 : i64, scratch_operands = 0 : i64, tpu.core_type = #tpu.core_type<tc>, window_params = [{transform_indices = @transform_0, window_bounds = array<i64: 8, 32>}, {pipeline_mode = #tpu.pipeline_mode<synchronous>, transform_indices = @transform_1, window_bounds = array<i64: 32, 1024>}, {pipeline_mode = #tpu.pipeline_mode<synchronous>, transform_indices = @transform_2, window_bounds = array<i64: 1, 1024>}, {pipeline_mode = #tpu.pipeline_mode<synchronous>, transform_indices = @transform_3, window_bounds = array<i64: 1024, 512>}, {pipeline_mode = #tpu.pipeline_mode<synchronous>, transform_indices = @transform_4, window_bounds = array<i64: 1, 512>}, {pipeline_mode = #tpu.pipeline_mode<synchronous>, transform_indices = @transform_5, window_bounds = array<i64: 512, 256>}, {pipeline_mode = #tpu.pipeline_mode<synchronous>, transform_indices = @transform_6, window_bounds = array<i64: 1, 256>}, {pipeline_mode = #tpu.pipeline_mode<synchronous>, transform_indices = @transform_7, window_bounds = array<i64: 256, 64>}, {pipeline_mode = #tpu.pipeline_mode<synchronous>, transform_indices = @transform_8, window_bounds = array<i64: 1, 64>}, {pipeline_mode = #tpu.pipeline_mode<synchronous>, transform_indices = @transform_9, window_bounds = array<i64: 1, 64>}, {pipeline_mode = #tpu.pipeline_mode<synchronous>, transform_indices = @transform_10, window_bounds = array<i64: 1, 1>}, {transform_indices = @transform_11, window_bounds = array<i64: 8, 1>}]} {
    %c0 = arith.constant 0 : index
    %c0_0 = arith.constant 0 : index
    %0 = vector.load %arg1[%c0, %c0_0] : memref<8x32xf32, #tpu.memory_space<vmem>>, vector<8x32xf32>
    %1 = arith.truncf %0 : vector<8x32xf32> to vector<8x32xbf16>
    %c0_1 = arith.constant 0 : index
    %c0_2 = arith.constant 0 : index
    %2 = vector.load %arg2[%c0_1, %c0_2] : memref<32x1024xbf16, #tpu.memory_space<vmem>>, vector<32x1024xbf16>
    %cst = arith.constant dense<0.000000e+00> : vector<8x1024xf32>
    %3 = tpu.matmul %1, %2, %cst {dimension_numbers = #tpu.dot_dimension_numbers<[1], [0], [0], [1], [0, 0, 1, 1], [], []>} : vector<8x32xbf16>, vector<32x1024xbf16>, vector<8x1024xf32> -> vector<8x1024xf32>
    %4 = arith.truncf %3 : vector<8x1024xf32> to vector<8x1024xbf16>
    %c0_3 = arith.constant 0 : index
    %c0_4 = arith.constant 0 : index
    %5 = vector.load %arg3[%c0_3, %c0_4] : memref<1x1024xbf16, #tpu.memory_space<vmem>>, vector<1x1024xbf16>
    %6 = vector.broadcast %5 : vector<1x1024xbf16> to vector<8x1024xbf16>
    %7 = arith.addf %4, %6 : vector<8x1024xbf16>
    %cst_5 = arith.constant 0.000000e+00 : bf16
    %8 = vector.broadcast %cst_5 : bf16 to vector<8x1024xbf16>
    %9 = arith.maximumf %7, %8 : vector<8x1024xbf16>
    %c0_6 = arith.constant 0 : index
    %c0_7 = arith.constant 0 : index
    %10 = vector.load %arg4[%c0_6, %c0_7] : memref<1024x512xbf16, #tpu.memory_space<vmem>>, vector<1024x512xbf16>
    %cst_8 = arith.constant dense<0.000000e+00> : vector<8x512xf32>
    %11 = tpu.matmul %9, %10, %cst_8 {dimension_numbers = #tpu.dot_dimension_numbers<[1], [0], [0], [1], [0, 0, 1, 1], [], []>} : vector<8x1024xbf16>, vector<1024x512xbf16>, vector<8x512xf32> -> vector<8x512xf32>
    %12 = arith.truncf %11 : vector<8x512xf32> to vector<8x512xbf16>
    %c0_9 = arith.constant 0 : index
    %c0_10 = arith.constant 0 : index
    %13 = vector.load %arg5[%c0_9, %c0_10] : memref<1x512xbf16, #tpu.memory_space<vmem>>, vector<1x512xbf16>
    %14 = vector.broadcast %13 : vector<1x512xbf16> to vector<8x512xbf16>
    %15 = arith.addf %12, %14 : vector<8x512xbf16>
    %cst_11 = arith.constant 0.000000e+00 : bf16
    %16 = vector.broadcast %cst_11 : bf16 to vector<8x512xbf16>
    %17 = arith.maximumf %15, %16 : vector<8x512xbf16>
    %c0_12 = arith.constant 0 : index
    %c0_13 = arith.constant 0 : index
    %18 = vector.load %arg6[%c0_12, %c0_13] : memref<512x256xbf16, #tpu.memory_space<vmem>>, vector<512x256xbf16>
    %cst_14 = arith.constant dense<0.000000e+00> : vector<8x256xf32>
    %19 = tpu.matmul %17, %18, %cst_14 {dimension_numbers = #tpu.dot_dimension_numbers<[1], [0], [0], [1], [0, 0, 1, 1], [], []>} : vector<8x512xbf16>, vector<512x256xbf16>, vector<8x256xf32> -> vector<8x256xf32>
    %20 = arith.truncf %19 : vector<8x256xf32> to vector<8x256xbf16>
    %c0_15 = arith.constant 0 : index
    %c0_16 = arith.constant 0 : index
    %21 = vector.load %arg7[%c0_15, %c0_16] : memref<1x256xbf16, #tpu.memory_space<vmem>>, vector<1x256xbf16>
    %22 = vector.broadcast %21 : vector<1x256xbf16> to vector<8x256xbf16>
    %23 = arith.addf %20, %22 : vector<8x256xbf16>
    %cst_17 = arith.constant 0.000000e+00 : bf16
    %24 = vector.broadcast %cst_17 : bf16 to vector<8x256xbf16>
    %25 = arith.maximumf %23, %24 : vector<8x256xbf16>
    %c0_18 = arith.constant 0 : index
    %c0_19 = arith.constant 0 : index
    %26 = vector.load %arg8[%c0_18, %c0_19] : memref<256x64xbf16, #tpu.memory_space<vmem>>, vector<256x64xbf16>
    %cst_20 = arith.constant dense<0.000000e+00> : vector<8x64xf32>
    %27 = tpu.matmul %25, %26, %cst_20 {dimension_numbers = #tpu.dot_dimension_numbers<[1], [0], [0], [1], [0, 0, 1, 1], [], []>} : vector<8x256xbf16>, vector<256x64xbf16>, vector<8x64xf32> -> vector<8x64xf32>
    %28 = arith.truncf %27 : vector<8x64xf32> to vector<8x64xbf16>
    %c0_21 = arith.constant 0 : index
    %c0_22 = arith.constant 0 : index
    %29 = vector.load %arg9[%c0_21, %c0_22] : memref<1x64xbf16, #tpu.memory_space<vmem>>, vector<1x64xbf16>
    %30 = vector.broadcast %29 : vector<1x64xbf16> to vector<8x64xbf16>
    %31 = arith.addf %28, %30 : vector<8x64xbf16>
    %cst_23 = arith.constant 0.000000e+00 : bf16
    %32 = vector.broadcast %cst_23 : bf16 to vector<8x64xbf16>
    %33 = arith.maximumf %31, %32 : vector<8x64xbf16>
    %c0_24 = arith.constant 0 : index
    %c0_25 = arith.constant 0 : index
    %34 = vector.load %arg10[%c0_24, %c0_25] : memref<1x64xbf16, #tpu.memory_space<vmem>>, vector<1x64xbf16>
    %35 = arith.extf %34 : vector<1x64xbf16> to vector<1x64xf32>
    %36 = arith.extf %33 : vector<8x64xbf16> to vector<8x64xf32>
    %37 = vector.broadcast %35 : vector<1x64xf32> to vector<8x64xf32>
    %38 = arith.mulf %36, %37 : vector<8x64xf32>
    %cst_26 = arith.constant dense<0.000000e+00> : vector<8xf32>
    %39 = vector.multi_reduction <add>, %38, %cst_26 [1] : vector<8x64xf32> to vector<8xf32>
    %40 = vector.shape_cast %39 : vector<8xf32> to vector<8x1xf32>
    %c0_27 = arith.constant 0 : index
    %c0_28 = arith.constant 0 : index
    %41 = vector.load %arg11[%c0_27, %c0_28] : memref<1x1xbf16, #tpu.memory_space<vmem>>, vector<1x1xbf16>
    %42 = arith.extf %41 : vector<1x1xbf16> to vector<1x1xf32>
    %43 = vector.broadcast %42 : vector<1x1xf32> to vector<8x1xf32>
    %44 = arith.addf %40, %43 : vector<8x1xf32>
    %c0_29 = arith.constant 0 : index
    %c0_30 = arith.constant 0 : index
    %45 = vector.load %arg12[%c0_29, %c0_30] : memref<8x1xf32, #tpu.memory_space<vmem>>, vector<8x1xf32>
    tpu.vector_store %arg12[%c0_29, %c0_30], %44 {strides = array<i32>} : memref<8x1xf32, #tpu.memory_space<vmem>>, vector<8x1xf32>,
    return
  }
  func.func @transform_0(%arg0: i32) -> (i32, i32) {
    %c0_i32 = arith.constant 0 : i32
    %c0_i32_0 = arith.constant 0 : i32
    return %arg0, %c0_i32 : i32, i32
  }
  func.func @transform_1(%arg0: i32) -> (i32, i32) {
    %c0_i32 = arith.constant 0 : i32
    %c0_i32_0 = arith.constant 0 : i32
    %c0_i32_1 = arith.constant 0 : i32
    return %c0_i32, %c0_i32_0 : i32, i32
  }
  func.func @transform_2(%arg0: i32) -> (i32, i32) {
    %c0_i32 = arith.constant 0 : i32
    %c0_i32_0 = arith.constant 0 : i32
    %c0_i32_1 = arith.constant 0 : i32
    return %c0_i32, %c0_i32_0 : i32, i32
  }
  func.func @transform_3(%arg0: i32) -> (i32, i32) {
    %c0_i32 = arith.constant 0 : i32
    %c0_i32_0 = arith.constant 0 : i32
    %c0_i32_1 = arith.constant 0 : i32
    return %c0_i32, %c0_i32_0 : i32, i32
  }
  func.func @transform_4(%arg0: i32) -> (i32, i32) {
    %c0_i32 = arith.constant 0 : i32
    %c0_i32_0 = arith.constant 0 : i32
    %c0_i32_1 = arith.constant 0 : i32
    return %c0_i32, %c0_i32_0 : i32, i32
  }
  func.func @transform_5(%arg0: i32) -> (i32, i32) {
    %c0_i32 = arith.constant 0 : i32
    %c0_i32_0 = arith.constant 0 : i32
    %c0_i32_1 = arith.constant 0 : i32
    return %c0_i32, %c0_i32_0 : i32, i32
  }
  func.func @transform_6(%arg0: i32) -> (i32, i32) {
    %c0_i32 = arith.constant 0 : i32
    %c0_i32_0 = arith.constant 0 : i32
    %c0_i32_1 = arith.constant 0 : i32
    return %c0_i32, %c0_i32_0 : i32, i32
  }
  func.func @transform_7(%arg0: i32) -> (i32, i32) {
    %c0_i32 = arith.constant 0 : i32
    %c0_i32_0 = arith.constant 0 : i32
    %c0_i32_1 = arith.constant 0 : i32
    return %c0_i32, %c0_i32_0 : i32, i32
  }
  func.func @transform_8(%arg0: i32) -> (i32, i32) {
    %c0_i32 = arith.constant 0 : i32
    %c0_i32_0 = arith.constant 0 : i32
    %c0_i32_1 = arith.constant 0 : i32
    return %c0_i32, %c0_i32_0 : i32, i32
  }
  func.func @transform_9(%arg0: i32) -> (i32, i32) {
    %c0_i32 = arith.constant 0 : i32
    %c0_i32_0 = arith.constant 0 : i32
    %c0_i32_1 = arith.constant 0 : i32
    return %c0_i32, %c0_i32_0 : i32, i32
  }
  func.func @transform_10(%arg0: i32) -> (i32, i32) {
    %c0_i32 = arith.constant 0 : i32
    %c0_i32_0 = arith.constant 0 : i32
    %c0_i32_1 = arith.constant 0 : i32
    return %c0_i32, %c0_i32_0 : i32, i32
  }
  func.func @transform_11(%arg0: i32) -> (i32, i32) {
    %c0_i32 = arith.constant 0 : i32
    %c0_i32_0 = arith.constant 0 : i32
    return %arg0, %c0_i32 : i32, i32
  }
}

</mosaic_0001>

<llo_original>
// kernel: logistic_map_nn_forward.1
$region0: #{logistic_map_nn_forward.1}
  #allocation0 [shape = 'u32[]', space=smem, size = 0x4, offset = 0x4, fixed_abs, tag = 'smem constant byte address 0x4 - core index']
  #allocation1 [shape = 'u32[144,128]{1,0:T(1,128)}', space=vmem, size = 0x12000, scoped, tag = 'internal scratch']
  #allocation2 [shape = 'bf16[1,1]{1,0:T(2,128)S(1)}', space=vmem, size = 0x200, scoped, tag = 'scoped memory for logistic_map_nn_forward.1']
  %s0 = inlined_call_operand.vmem [shape: f32[8,32], index: 0, kind: input, shape index: {}]
  %s1 = inlined_call_operand.vmem [shape: bf16[32,1024], index: 1, kind: input, shape index: {}]
  %s2 = inlined_call_operand.vmem [shape: bf16[1,1024], index: 2, kind: input, shape index: {}]
  %s3 = inlined_call_operand.hbm [shape: bf16[1024,512], index: 3, kind: input, shape index: {}]
  %s4 = inlined_call_operand.vmem [shape: bf16[1,512], index: 4, kind: input, shape index: {}]
  %s5 = inlined_call_operand.hbm [shape: bf16[512,256], index: 5, kind: input, shape index: {}]
  %s6 = inlined_call_operand.vmem [shape: bf16[1,256], index: 6, kind: input, shape index: {}]
  %s7 = inlined_call_operand.vmem [shape: bf16[256,64], index: 7, kind: input, shape index: {}]
  %s8 = inlined_call_operand.vmem [shape: bf16[1,64], index: 8, kind: input, shape index: {}]
  %s9 = inlined_call_operand.vmem [shape: bf16[1,64], index: 9, kind: input, shape index: {}]
  %s10 = inlined_call_operand.<no memory space> [shape: bf16[1,1], index: 10, kind: input, shape index: {}]
  %s11 = inlined_call_operand.vmem [shape: f32[8,1], index: 11, kind: output, shape index: {}]
  %s12 = sld [smem:[#allocation0]]
  $region62: #{logistic_map_nn_forward.1} parent=0
    _
  %s14 = ssub.s32 1, %s12
  %s15 = scalar_select 0, %s14, %s12
  %v16 = vstv %s10
  %17 = vst [vmem:[#allocation2] sm:$0x1] %v16
  $region1: #{logistic_map_nn_forward.1} parent=0
    #allocation3 [shape = 'u8[1048576]{0}', space=vmem, size = 0x100000, scoped, tag = 'input window, operand 3, single buffered']
    #allocation4 [shape = 's32[1]{0}', space=sflag, size = 0x4, scoped, tag = 'scoped memory for logistic_map_nn_forward.1']
    #allocation5 [shape = 'u8[262144]{0}', space=vmem, size = 0x40000, scoped, tag = 'input window, operand 5, single buffered']
    #allocation6 [shape = 's32[1]{0}', space=sflag, size = 0x4, scoped, tag = 'scoped memory for logistic_map_nn_forward.1']
    %18 = vsyncpa [#allocation4], 0
    %19 = vsyncpa [#allocation6], 0
    // Predicated region
    $region2: #{logistic_map_nn_forward.1} parent=1 // pred_check
      _
    $region3: #{logistic_map_nn_forward.1} parent=1 // pred_check_branch
      %21 = sbr.rel (0) target = $region5
    $region4: #{logistic_map_nn_forward.1} parent=1 // pred_region
      _
    $region5: #{logistic_map_nn_forward.1} parent=1 // pred_fallthru
      _
    // Predicated region
    $region6: #{logistic_map_nn_forward.1} parent=1 // pred_check
      _
    $region7: #{logistic_map_nn_forward.1} parent=1 // pred_check_branch
      %23 = sbr.rel (0) target = $region9
    $region8: #{logistic_map_nn_forward.1} parent=1 // pred_region
      _
    $region9: #{logistic_map_nn_forward.1} parent=1 // pred_fallthru
      _
    // Predicated region
    $region10: #{logistic_map_nn_forward.1} parent=1 // pred_check
      _
    $region11: #{logistic_map_nn_forward.1} parent=1 // pred_check_branch
      %25 = sbr.rel (0) target = $region13
    $region12: #{logistic_map_nn_forward.1} parent=1 // pred_region
      _
    $region13: #{logistic_map_nn_forward.1} parent=1 // pred_fallthru
      _
    // Predicated region
    $region14: #{logistic_map_nn_forward.1} parent=1 // pred_check
      _
    $region15: #{logistic_map_nn_forward.1} parent=1 // pred_check_branch
      %27 = sbr.rel (0) target = $region17
    $region16: #{logistic_map_nn_forward.1} parent=1 // pred_region
      %s29 = ssub.s32 32768, 32768
      %30 = vsyncadd [#allocation4], %s29
      %s31 = sshll.u32 [#allocation3], 4
      %s32 = int_to_ptr.vmem [resolvable:$true] %s31
      %37 = dma.hbm_to_vmem [thread:$0]  %s3, 32768, %s32, [#allocation4], 256, 256, 16
    $region17: #{logistic_map_nn_forward.1} parent=1 // pred_fallthru
      _
    // Predicated region
    $region18: #{logistic_map_nn_forward.1} parent=1 // pred_check
      _
    $region19: #{logistic_map_nn_forward.1} parent=1 // pred_check_branch
      %39 = sbr.rel (0) target = $region21
    $region20: #{logistic_map_nn_forward.1} parent=1 // pred_region
      _
    $region21: #{logistic_map_nn_forward.1} parent=1 // pred_fallthru
      _
    // Predicated region
    $region22: #{logistic_map_nn_forward.1} parent=1 // pred_check
      _
    $region23: #{logistic_map_nn_forward.1} parent=1 // pred_check_branch
      %41 = sbr.rel (0) target = $region25
    $region24: #{logistic_map_nn_forward.1} parent=1 // pred_region
      %s43 = ssub.s32 8192, 8192
      %44 = vsyncadd [#allocation6], %s43
      %s45 = sshll.u32 [#allocation5], 4
      %s46 = int_to_ptr.vmem [resolvable:$true] %s45
      %51 = dma.hbm_to_vmem [thread:$0]  %s5, 8192, %s46, [#allocation6], 128, 128, 8
    $region25: #{logistic_map_nn_forward.1} parent=1 // pred_fallthru
      _
    // Predicated region
    $region26: #{logistic_map_nn_forward.1} parent=1 // pred_check
      _
    $region27: #{logistic_map_nn_forward.1} parent=1 // pred_check_branch
      %53 = sbr.rel (0) target = $region29
    $region28: #{logistic_map_nn_forward.1} parent=1 // pred_region
      _
    $region29: #{logistic_map_nn_forward.1} parent=1 // pred_fallthru
      _
    // Predicated region
    $region30: #{logistic_map_nn_forward.1} parent=1 // pred_check
      _
    $region31: #{logistic_map_nn_forward.1} parent=1 // pred_check_branch
      %55 = sbr.rel (0) target = $region33
    $region32: #{logistic_map_nn_forward.1} parent=1 // pred_region
      _
    $region33: #{logistic_map_nn_forward.1} parent=1 // pred_fallthru
      _
    // Predicated region
    $region34: #{logistic_map_nn_forward.1} parent=1 // pred_check
      _
    $region35: #{logistic_map_nn_forward.1} parent=1 // pred_check_branch
      %57 = sbr.rel (0) target = $region37
    $region36: #{logistic_map_nn_forward.1} parent=1 // pred_region
      _
    $region37: #{logistic_map_nn_forward.1} parent=1 // pred_fallthru
      _
    // Predicated region
    $region38: #{logistic_map_nn_forward.1} parent=1 // pred_check
      _
    $region39: #{logistic_map_nn_forward.1} parent=1 // pred_check_branch
      %59 = sbr.rel (0) target = $region41
    $region40: #{logistic_map_nn_forward.1} parent=1 // pred_region
      _
    $region41: #{logistic_map_nn_forward.1} parent=1 // pred_fallthru
      _
    // Predicated region
    $region42: #{logistic_map_nn_forward.1} parent=1 // pred_check
      _
    $region43: #{logistic_map_nn_forward.1} parent=1 // pred_check_branch
      %61 = sbr.rel (0) target = $region45
    $region44: #{logistic_map_nn_forward.1} parent=1 // pred_region
      _
    $region45: #{logistic_map_nn_forward.1} parent=1 // pred_fallthru
      _
    // Predicated region
    $region46: #{logistic_map_nn_forward.1} parent=1 // pred_check
      _
    $region47: #{logistic_map_nn_forward.1} parent=1 // pred_check_branch
      %63 = sbr.rel (0) target = $region49
    $region48: #{logistic_map_nn_forward.1} parent=1 // pred_region
      %64 = dma.done [#allocation4], 32768
    $region49: #{logistic_map_nn_forward.1} parent=1 // pred_fallthru
      _
    // Predicated region
    $region50: #{logistic_map_nn_forward.1} parent=1 // pred_check
      _
    $region51: #{logistic_map_nn_forward.1} parent=1 // pred_check_branch
      %66 = sbr.rel (0) target = $region53
    $region52: #{logistic_map_nn_forward.1} parent=1 // pred_region
      %67 = dma.done [#allocation6], 8192
    $region53: #{logistic_map_nn_forward.1} parent=1 // pred_fallthru
      _
    %v69 = vld [vmem:[%s0] sm:$0xff]
    %v70 = vpack.c.bf16 %v69, %v69
    %v71 = vld [vmem:[%s1] sm:$0xff]
    %v72 = vld [vmem:[%s1 + $0x8] sm:$0xff]
    %v73 = vld [vmem:[%s1 + $0x10] sm:$0xff]
    %v74 = vld [vmem:[%s1 + $0x18] sm:$0xff]
    %v75 = vld [vmem:[%s1 + $0x20] sm:$0xff]
    %v76 = vld [vmem:[%s1 + $0x28] sm:$0xff]
    %v77 = vld [vmem:[%s1 + $0x30] sm:$0xff]
    %v78 = vld [vmem:[%s1 + $0x38] sm:$0xff]
    %v79 = vld [vmem:[%s1 + $0x40] sm:$0xff]
    %v80 = vld [vmem:[%s1 + $0x48] sm:$0xff]
    %v81 = vld [vmem:[%s1 + $0x50] sm:$0xff]
    %v82 = vld [vmem:[%s1 + $0x58] sm:$0xff]
    %v83 = vld [vmem:[%s1 + $0x60] sm:$0xff]
    %v84 = vld [vmem:[%s1 + $0x68] sm:$0xff]
    %v85 = vld [vmem:[%s1 + $0x70] sm:$0xff]
    %v86 = vld [vmem:[%s1 + $0x78] sm:$0xff]
    %v103 = vunpack.c.l.b16 %v71
    %v104 = vunpack.c.h.b16 %v71
    %v105 = vunpack.c.l.b16 %v72
    %v106 = vunpack.c.h.b16 %v72
    %v107 = vunpack.c.l.b16 %v73
    %v108 = vunpack.c.h.b16 %v73
    %v109 = vunpack.c.l.b16 %v74
    %v110 = vunpack.c.h.b16 %v74
    %v111 = vunpack.c.l.b16 %v75
    %v112 = vunpack.c.h.b16 %v75
    %v113 = vunpack.c.l.b16 %v76
    %v114 = vunpack.c.h.b16 %v76
    %v115 = vunpack.c.l.b16 %v77
    %v116 = vunpack.c.h.b16 %v77
    %v117 = vunpack.c.l.b16 %v78
    %v118 = vunpack.c.h.b16 %v78
    %v119 = vunpack.c.l.b16 %v79
    %v120 = vunpack.c.h.b16 %v79
    %v121 = vunpack.c.l.b16 %v80
    %v122 = vunpack.c.h.b16 %v80
    %v123 = vunpack.c.l.b16 %v81
    %v124 = vunpack.c.h.b16 %v81
    %v125 = vunpack.c.l.b16 %v82
    %v126 = vunpack.c.h.b16 %v82
    %v127 = vunpack.c.l.b16 %v83
    %v128 = vunpack.c.h.b16 %v83
    %v129 = vunpack.c.l.b16 %v84
    %v130 = vunpack.c.h.b16 %v84
    %v131 = vunpack.c.l.b16 %v85
    %v132 = vunpack.c.h.b16 %v85
    %v133 = vunpack.c.l.b16 %v86
    %v134 = vunpack.c.h.b16 %v86
    %v135 = vpack.c.b16 %v111, %v103
    %v136 = vpack.c.b16 %v112, %v104
    %v137 = vpack.c.b16 %v113, %v105
    %v138 = vpack.c.b16 %v114, %v106
    %v139 = vpack.c.b16 %v115, %v107
    %v140 = vpack.c.b16 %v116, %v108
    %v141 = vpack.c.b16 %v117, %v109
    %v142 = vpack.c.b16 %v118, %v110
    %v143 = vpack.c.b16 %v127, %v119
    %v144 = vpack.c.b16 %v128, %v120
    %v145 = vpack.c.b16 %v129, %v121
    %v146 = vpack.c.b16 %v130, %v122
    %v147 = vpack.c.b16 %v131, %v123
    %v148 = vpack.c.b16 %v132, %v124
    %v149 = vpack.c.b16 %v133, %v125
    %v150 = vpack.c.b16 %v134, %v126
    %vm167 = vcmask 261120
    %v169 = vsel %vm167, %v70, 0
    %171 = vmatprep.subr.bf16.mxu0 0
    %172 = vmatpush1.bf16.msra.mxu0 0
    %173 = vmatprep.subr.bf16.mxu0 0
    %174 = vmatpush1.bf16.msra.mxu0 0
    %175 = vmatprep.subr.bf16.mxu0 0
    %176 = vmatpush1.bf16.msra.mxu0 0
    %177 = vmatprep.subr.bf16.mxu0 0
    %178 = vmatpush1.bf16.msra.mxu0 0
    %179 = vmatprep.subr.bf16.mxu0 0
    %180 = vmatpush1.bf16.msra.mxu0 0
    %181 = vmatprep.subr.bf16.mxu0 0
    %182 = vmatpush1.bf16.msra.mxu0 0
    %183 = vmatprep.subr.bf16.mxu0 %v144
    %184 = vmatpush1.bf16.msra.mxu0 %v143
    %185 = vmatprep.subr.bf16.mxu0 %v136
    %186 = vmatpush1.bf16.msra.mxu0 %v135
    %187 = vmatprep.subr.bf16.mxu0 0
    %188 = vmatpush2.bf16.msra.mxu0 0
    %189 = vmatprep.subr.bf16.mxu0 0
    %190 = vmatpush2.bf16.msra.mxu0 0
    %191 = vmatprep.subr.bf16.mxu0 0
    %192 = vmatpush2.bf16.msra.mxu0 0
    %193 = vmatprep.subr.bf16.mxu0 0
    %194 = vmatpush2.bf16.msra.mxu0 0
    %195 = vmatprep.subr.bf16.mxu0 0
    %196 = vmatpush2.bf16.msra.mxu0 0
    %197 = vmatprep.subr.bf16.mxu0 0
    %198 = vmatpush2.bf16.msra.mxu0 0
    %199 = vmatprep.subr.bf16.mxu0 0
    %200 = vmatpush2.bf16.msra.mxu0 0
    %201 = vmatprep.subr.bf16.mxu0 0
    %202 = vmatpush2.bf16.msra.mxu0 0
    %203 = vmatprep.mubr.bf16.mxu0 0
    %204 = vmatmul.mubr.bf16.gmra.mxu0 %v169
    %v205 = vpop.f32.mrf.mxu0
    %v206 = vadd.f32 0.0, %v205
    %v207 = vpop.f32.mrf.mxu0
    %v208 = vadd.f32 0.0, %v207
    %v209 = vpop.f32.mrf.mxu0
    %v210 = vpop.f32.mrf.mxu0
    %211 = vdwg.mxu0
    %212 = vmatprep.subr.bf16.mxu0 0
    %213 = vmatpush1.bf16.msra.mxu0 0
    %214 = vmatprep.subr.bf16.mxu0 0
    %215 = vmatpush1.bf16.msra.mxu0 0
    %216 = vmatprep.subr.bf16.mxu0 0
    %217 = vmatpush1.bf16.msra.mxu0 0
    %218 = vmatprep.subr.bf16.mxu0 0
    %219 = vmatpush1.bf16.msra.mxu0 0
    %220 = vmatprep.subr.bf16.mxu0 0
    %221 = vmatpush1.bf16.msra.mxu0 0
    %222 = vmatprep.subr.bf16.mxu0 0
    %223 = vmatpush1.bf16.msra.mxu0 0
    %224 = vmatprep.subr.bf16.mxu0 %v146
    %225 = vmatpush1.bf16.msra.mxu0 %v145
    %226 = vmatprep.subr.bf16.mxu0 %v138
    %227 = vmatpush1.bf16.msra.mxu0 %v137
    %228 = vmatprep.subr.bf16.mxu0 0
    %229 = vmatpush2.bf16.msra.mxu0 0
    %230 = vmatprep.subr.bf16.mxu0 0
    %231 = vmatpush2.bf16.msra.mxu0 0
    %232 = vmatprep.subr.bf16.mxu0 0
    %233 = vmatpush2.bf16.msra.mxu0 0
    %234 = vmatprep.subr.bf16.mxu0 0
    %235 = vmatpush2.bf16.msra.mxu0 0
    %236 = vmatprep.subr.bf16.mxu0 0
    %237 = vmatpush2.bf16.msra.mxu0 0
    %238 = vmatprep.subr.bf16.mxu0 0
    %239 = vmatpush2.bf16.msra.mxu0 0
    %240 = vmatprep.subr.bf16.mxu0 0
    %241 = vmatpush2.bf16.msra.mxu0 0
    %242 = vmatprep.subr.bf16.mxu0 0
    %243 = vmatpush2.bf16.msra.mxu0 0
    %244 = vmatprep.mubr.bf16.mxu0 0
    %245 = vmatmul.mubr.bf16.gmra.mxu0 %v169
    %v246 = vpop.f32.mrf.mxu0
    %v247 = vadd.f32 0.0, %v246
    %v248 = vpop.f32.mrf.mxu0
    %v249 = vadd.f32 0.0, %v248
    %v250 = vpop.f32.mrf.mxu0
    %v251 = vpop.f32.mrf.mxu0
    %252 = vdwg.mxu0
    %253 = vmatprep.subr.bf16.mxu0 0
    %254 = vmatpush1.bf16.msra.mxu0 0
    %255 = vmatprep.subr.bf16.mxu0 0
    %256 = vmatpush1.bf16.msra.mxu0 0
    %257 = vmatprep.subr.bf16.mxu0 0
    %258 = vmatpush1.bf16.msra.mxu0 0
    %259 = vmatprep.subr.bf16.mxu0 0
    %260 = vmatpush1.bf16.msra.mxu0 0
    %261 = vmatprep.subr.bf16.mxu0 0
    %262 = vmatpush1.bf16.msra.mxu0 0
    %263 = vmatprep.subr.bf16.mxu0 0
    %264 = vmatpush1.bf16.msra.mxu0 0
    %265 = vmatprep.subr.bf16.mxu0 %v148
    %266 = vmatpush1.bf16.msra.mxu0 %v147
    %267 = vmatprep.subr.bf16.mxu0 %v140
    %268 = vmatpush1.bf16.msra.mxu0 %v139
    %269 = vmatprep.subr.bf16.mxu0 0
    %270 = vmatpush2.bf16.msra.mxu0 0
    %271 = vmatprep.subr.bf16.mxu0 0
    %272 = vmatpush2.bf16.msra.mxu0 0
    %273 = vmatprep.subr.bf16.mxu0 0
    %274 = vmatpush2.bf16.msra.mxu0 0
    %275 = vmatprep.subr.bf16.mxu0 0
    %276 = vmatpush2.bf16.msra.mxu0 0
    %277 = vmatprep.subr.bf16.mxu0 0
    %278 = vmatpush2.bf16.msra.mxu0 0
    %279 = vmatprep.subr.bf16.mxu0 0
    %280 = vmatpush2.bf16.msra.mxu0 0
    %281 = vmatprep.subr.bf16.mxu0 0
    %282 = vmatpush2.bf16.msra.mxu0 0
    %283 = vmatprep.subr.bf16.mxu0 0
    %284 = vmatpush2.bf16.msra.mxu0 0
    %285 = vmatprep.mubr.bf16.mxu0 0
    %286 = vmatmul.mubr.bf16.gmra.mxu0 %v169
    %v287 = vpop.f32.mrf.mxu0
    %v288 = vadd.f32 0.0, %v287
    %v289 = vpop.f32.mrf.mxu0
    %v290 = vadd.f32 0.0, %v289
    %v291 = vpop.f32.mrf.mxu0
    %v292 = vpop.f32.mrf.mxu0
    %293 = vdwg.mxu0
    %294 = vmatprep.subr.bf16.mxu0 0
    %295 = vmatpush1.bf16.msra.mxu0 0
    %296 = vmatprep.subr.bf16.mxu0 0
    %297 = vmatpush1.bf16.msra.mxu0 0
    %298 = vmatprep.subr.bf16.mxu0 0
    %299 = vmatpush1.bf16.msra.mxu0 0
    %300 = vmatprep.subr.bf16.mxu0 0
    %301 = vmatpush1.bf16.msra.mxu0 0
    %302 = vmatprep.subr.bf16.mxu0 0
    %303 = vmatpush1.bf16.msra.mxu0 0
    %304 = vmatprep.subr.bf16.mxu0 0
    %305 = vmatpush1.bf16.msra.mxu0 0
    %306 = vmatprep.subr.bf16.mxu0 %v150
    %307 = vmatpush1.bf16.msra.mxu0 %v149
    %308 = vmatprep.subr.bf16.mxu0 %v142
    %309 = vmatpush1.bf16.msra.mxu0 %v141
    %310 = vmatprep.subr.bf16.mxu0 0
    %311 = vmatpush2.bf16.msra.mxu0 0
    %312 = vmatprep.subr.bf16.mxu0 0
    %313 = vmatpush2.bf16.msra.mxu0 0
    %314 = vmatprep.subr.bf16.mxu0 0
    %315 = vmatpush2.bf16.msra.mxu0 0
    %316 = vmatprep.subr.bf16.mxu0 0
    %317 = vmatpush2.bf16.msra.mxu0 0
    %318 = vmatprep.subr.bf16.mxu0 0
    %319 = vmatpush2.bf16.msra.mxu0 0
    %320 = vmatprep.subr.bf16.mxu0 0
    %321 = vmatpush2.bf16.msra.mxu0 0
    %322 = vmatprep.subr.bf16.mxu0 0
    %323 = vmatpush2.bf16.msra.mxu0 0
    %324 = vmatprep.subr.bf16.mxu0 0
    %325 = vmatpush2.bf16.msra.mxu0 0
    %326 = vmatprep.mubr.bf16.mxu0 0
    %327 = vmatmul.mubr.bf16.gmra.mxu0 %v169
    %v328 = vpop.f32.mrf.mxu0
    %v329 = vadd.f32 0.0, %v328
    %v330 = vpop.f32.mrf.mxu0
    %v331 = vadd.f32 0.0, %v330
    %v332 = vpop.f32.mrf.mxu0
    %v333 = vpop.f32.mrf.mxu0
    %334 = vdwg.mxu0
    %v335 = vpack.c.bf16 %v206, %v206
    %v336 = vpack.c.bf16 %v208, %v208
    %v337 = vpack.c.bf16 %v247, %v247
    %v338 = vpack.c.bf16 %v249, %v249
    %v339 = vpack.c.bf16 %v288, %v288
    %v340 = vpack.c.bf16 %v290, %v290
    %v341 = vpack.c.bf16 %v329, %v329
    %v342 = vpack.c.bf16 %v331, %v331
    %v343 = vld [vmem:[%s2] sm:$0xff]
    %v345 = vcombine.high %v343, %v343
    %v347 = vunpack.c.l.s4 1966171168
    %v348 = vunpack.c.0.s8 %v347
    %v349 = vlaneseq
    %v350 = vshrl.u32 %v349, 7
    %v351 = vsub.s32 %v348, %v350
    %v352 = vrot.slane %v343, %v351
    %v354 = vunpack.c.l.s4 1966171168
    %v355 = vunpack.c.0.s8 %v354
    %v356 = vlaneseq
    %v357 = vshrl.u32 %v356, 7
    %v358 = vsub.s32 %v355, %v357
    %v359 = vrot.slane %v345, %v358
    %v360 = vcombine.high %v352, %v352
    %v361 = vcombine.high %v359, %v359
    %v363 = vunpack.c.l.s4 1966171168
    %v364 = vunpack.c.0.s8 %v363
    %v365 = vlaneseq
    %v366 = vshrl.u32 %v365, 7
    %v367 = vsub.s32 %v364, %v366
    %v368 = vrot.slane %v352, %v367
    %v370 = vunpack.c.l.s4 1966171168
    %v371 = vunpack.c.0.s8 %v370
    %v372 = vlaneseq
    %v373 = vshrl.u32 %v372, 7
    %v374 = vsub.s32 %v371, %v373
    %v375 = vrot.slane %v359, %v374
    %v377 = vunpack.c.l.s4 1966171168
    %v378 = vunpack.c.0.s8 %v377
    %v379 = vlaneseq
    %v380 = vshrl.u32 %v379, 7
    %v381 = vsub.s32 %v378, %v380
    %v382 = vrot.slane %v360, %v381
    %v384 = vunpack.c.l.s4 1966171168
    %v385 = vunpack.c.0.s8 %v384
    %v386 = vlaneseq
    %v387 = vshrl.u32 %v386, 7
    %v388 = vsub.s32 %v385, %v387
    %v389 = vrot.slane %v361, %v388
    %v390 = vcombine.high %v368, %v368
    %v391 = vcombine.high %v375, %v375
    %v392 = vcombine.high %v382, %v382
    %v393 = vcombine.high %v389, %v389
    %v395 = vpack.i.b16 %v368, %v368
    %v397 = vlaneseq
    %v398 = vshrl.u32 %v397, 7
    %v399 = vsub.s32 0, %v398
    %v400 = vrot.slane %v395, %v399
    %v402 = vpack.i.b16 %v382, %v382
    %v404 = vlaneseq
    %v405 = vshrl.u32 %v404, 7
    %v406 = vsub.s32 0, %v405
    %v407 = vrot.slane %v402, %v406
    %v409 = vpack.i.b16 %v390, %v390
    %v411 = vlaneseq
    %v412 = vshrl.u32 %v411, 7
    %v413 = vsub.s32 0, %v412
    %v414 = vrot.slane %v409, %v413
    %v416 = vpack.i.b16 %v392, %v392
    %v418 = vlaneseq
    %v419 = vshrl.u32 %v418, 7
    %v420 = vsub.s32 0, %v419
    %v421 = vrot.slane %v416, %v420
    %v423 = vpack.i.b16 %v375, %v375
    %v425 = vlaneseq
    %v426 = vshrl.u32 %v425, 7
    %v427 = vsub.s32 0, %v426
    %v428 = vrot.slane %v423, %v427
    %v430 = vpack.i.b16 %v389, %v389
    %v432 = vlaneseq
    %v433 = vshrl.u32 %v432, 7
    %v434 = vsub.s32 0, %v433
    %v435 = vrot.slane %v430, %v434
    %v437 = vpack.i.b16 %v391, %v391
    %v439 = vlaneseq
    %v440 = vshrl.u32 %v439, 7
    %v441 = vsub.s32 0, %v440
    %v442 = vrot.slane %v437, %v441
    %v444 = vpack.i.b16 %v393, %v393
    %v446 = vlaneseq
    %v447 = vshrl.u32 %v446, 7
    %v448 = vsub.s32 0, %v447
    %v449 = vrot.slane %v444, %v448
    %v450 = vadd.bf16 %v335, %v400
    %v451 = vadd.bf16 %v336, %v407
    %v452 = vadd.bf16 %v337, %v414
    %v453 = vadd.bf16 %v338, %v421
    %v454 = vadd.bf16 %v339, %v428
    %v455 = vadd.bf16 %v340, %v435
    %v456 = vadd.bf16 %v341, %v442
    %v457 = vadd.bf16 %v342, %v449
    %v458 = vmax.bf16 %v450, 0
    %v459 = vmax.bf16 %v451, 0
    %v460 = vmax.bf16 %v452, 0
    %v461 = vmax.bf16 %v453, 0
    %v462 = vmax.bf16 %v454, 0
    %v463 = vmax.bf16 %v455, 0
    %v464 = vmax.bf16 %v456, 0
    %v465 = vmax.bf16 %v457, 0
    %v466 = vld [vmem:[#allocation3] sm:$0xff]
    %v467 = vld [vmem:[#allocation3 + $0x8] sm:$0xff]
    %v468 = vld [vmem:[#allocation3 + $0x10] sm:$0xff]
    %v469 = vld [vmem:[#allocation3 + $0x18] sm:$0xff]
    %v470 = vld [vmem:[#allocation3 + $0x20] sm:$0xff]
    %v471 = vld [vmem:[#allocation3 + $0x28] sm:$0xff]
    %v472 = vld [vmem:[#allocation3 + $0x30] sm:$0xff]
    %v473 = vld [vmem:[#allocation3 + $0x38] sm:$0xff]
    %v474 = vld [vmem:[#allocation3 + $0x40] sm:$0xff]
    %v475 = vld [vmem:[#allocation3 + $0x48] sm:$0xff]
    %v476 = vld [vmem:[#allocation3 + $0x50] sm:$0xff]
    %v477 = vld [vmem:[#allocation3 + $0x58] sm:$0xff]
    %v478 = vld [vmem:[#allocation3 + $0x60] sm:$0xff]
    %v479 = vld [vmem:[#allocation3 + $0x68] sm:$0xff]
    %v480 = vld [vmem:[#allocation3 + $0x70] sm:$0xff]
    %v481 = vld [vmem:[#allocation3 + $0x78] sm:$0xff]
    %v482 = vld [vmem:[#allocation3 + $0x80] sm:$0xff]
    %v483 = vld [vmem:[#allocation3 + $0x88] sm:$0xff]
    %v484 = vld [vmem:[#allocation3 + $0x90] sm:$0xff]
    %v485 = vld [vmem:[#allocation3 + $0x98] sm:$0xff]
    %v486 = vld [vmem:[#allocation3 + $0xa0] sm:$0xff]
    %v487 = vld [vmem:[#allocation3 + $0xa8] sm:$0xff]
    %v488 = vld [vmem:[#allocation3 + $0xb0] sm:$0xff]
    %v489 = vld [vmem:[#allocation3 + $0xb8] sm:$0xff]
    %v490 = vld [vmem:[#allocation3 + $0xc0] sm:$0xff]
    %v491 = vld [vmem:[#allocation3 + $0xc8] sm:$0xff]
    %v492 = vld [vmem:[#allocation3 + $0xd0] sm:$0xff]
    %v493 = vld [vmem:[#allocation3 + $0xd8] sm:$0xff]
    %v494 = vld [vmem:[#allocation3 + $0xe0] sm:$0xff]
    %v495 = vld [vmem:[#allocation3 + $0xe8] sm:$0xff]
    %v496 = vld [vmem:[#allocation3 + $0xf0] sm:$0xff]
    %v497 = vld [vmem:[#allocation3 + $0xf8] sm:$0xff]
    %v498 = vld [vmem:[#allocation3 + $0x100] sm:$0xff]
    %v499 = vld [vmem:[#allocation3 + $0x108] sm:$0xff]
    %v500 = vld [vmem:[#allocation3 + $0x110] sm:$0xff]
    %v501 = vld [vmem:[#allocation3 + $0x118] sm:$0xff]
    %v502 = vld [vmem:[#allocation3 + $0x120] sm:$0xff]
    %v503 = vld [vmem:[#allocation3 + $0x128] sm:$0xff]
    %v504 = vld [vmem:[#allocation3 + $0x130] sm:$0xff]
    %v505 = vld [vmem:[#allocation3 + $0x138] sm:$0xff]
    %v506 = vld [vmem:[#allocation3 + $0x140] sm:$0xff]
    %v507 = vld [vmem:[#allocation3 + $0x148] sm:$0xff]
    %v508 = vld [vmem:[#allocation3 + $0x150] sm:$0xff]
    %v509 = vld [vmem:[#allocation3 + $0x158] sm:$0xff]
    %v510 = vld [vmem:[#allocation3 + $0x160] sm:$0xff]
    %v511 = vld [vmem:[#allocation3 + $0x168] sm:$0xff]
    %v512 = vld [vmem:[#allocation3 + $0x170] sm:$0xff]
    %v513 = vld [vmem:[#allocation3 + $0x178] sm:$0xff]
    %v514 = vld [vmem:[#allocation3 + $0x180] sm:$0xff]
    %v515 = vld [vmem:[#allocation3 + $0x188] sm:$0xff]
    %v516 = vld [vmem:[#allocation3 + $0x190] sm:$0xff]
    %v517 = vld [vmem:[#allocation3 + $0x198] sm:$0xff]
    %v518 = vld [vmem:[#allocation3 + $0x1a0] sm:$0xff]
    %v519 = vld [vmem:[#allocation3 + $0x1a8] sm:$0xff]
    %v520 = vld [vmem:[#allocation3 + $0x1b0] sm:$0xff]
    %v521 = vld [vmem:[#allocation3 + $0x1b8] sm:$0xff]
    %v522 = vld [vmem:[#allocation3 + $0x1c0] sm:$0xff]
    %v523 = vld [vmem:[#allocation3 + $0x1c8] sm:$0xff]
    %v524 = vld [vmem:[#allocation3 + $0x1d0] sm:$0xff]
    %v525 = vld [vmem:[#allocation3 + $0x1d8] sm:$0xff]
    %v526 = vld [vmem:[#allocation3 + $0x1e0] sm:$0xff]
    %v527 = vld [vmem:[#allocation3 + $0x1e8] sm:$0xff]
    %v528 = vld [vmem:[#allocation3 + $0x1f0] sm:$0xff]
    %v529 = vld [vmem:[#allocation3 + $0x1f8] sm:$0xff]
    %v530 = vld [vmem:[#allocation3 + $0x200] sm:$0xff]
    %v531 = vld [vmem:[#allocation3 + $0x208] sm:$0xff]
    %v532 = vld [vmem:[#allocation3 + $0x210] sm:$0xff]
    %v533 = vld [vmem:[#allocation3 + $0x218] sm:$0xff]
    %v534 = vld [vmem:[#allocation3 + $0x220] sm:$0xff]
    %v535 = vld [vmem:[#allocation3 + $0x228] sm:$0xff]
    %v536 = vld [vmem:[#allocation3 + $0x230] sm:$0xff]
    %v537 = vld [vmem:[#allocation3 + $0x238] sm:$0xff]
    %v538 = vld [vmem:[#allocation3 + $0x240] sm:$0xff]
    %v539 = vld [vmem:[#allocation3 + $0x248] sm:$0xff]
    %v540 = vld [vmem:[#allocation3 + $0x250] sm:$0xff]
    %v541 = vld [vmem:[#allocation3 + $0x258] sm:$0xff]
    %v542 = vld [vmem:[#allocation3 + $0x260] sm:$0xff]
    %v543 = vld [vmem:[#allocation3 + $0x268] sm:$0xff]
    %v544 = vld [vmem:[#allocation3 + $0x270] sm:$0xff]
    %v545 = vld [vmem:[#allocation3 + $0x278] sm:$0xff]
    %v546 = vld [vmem:[#allocation3 + $0x280] sm:$0xff]
    %v547 = vld [vmem:[#allocation3 + $0x288] sm:$0xff]
    %v548 = vld [vmem:[#allocation3 + $0x290] sm:$0xff]
    %v549 = vld [vmem:[#allocation3 + $0x298] sm:$0xff]
    %v550 = vld [vmem:[#allocation3 + $0x2a0] sm:$0xff]
    %v551 = vld [vmem:[#allocation3 + $0x2a8] sm:$0xff]
    %v552 = vld [vmem:[#allocation3 + $0x2b0] sm:$0xff]
    %v553 = vld [vmem:[#allocation3 + $0x2b8] sm:$0xff]
    %v554 = vld [vmem:[#allocation3 + $0x2c0] sm:$0xff]
    %v555 = vld [vmem:[#allocation3 + $0x2c8] sm:$0xff]
    %v556 = vld [vmem:[#allocation3 + $0x2d0] sm:$0xff]
    %v557 = vld [vmem:[#allocation3 + $0x2d8] sm:$0xff]
    %v558 = vld [vmem:[#allocation3 + $0x2e0] sm:$0xff]
    %v559 = vld [vmem:[#allocation3 + $0x2e8] sm:$0xff]
    %v560 = vld [vmem:[#allocation3 + $0x2f0] sm:$0xff]
    %v561 = vld [vmem:[#allocation3 + $0x2f8] sm:$0xff]
    %v562 = vld [vmem:[#allocation3 + $0x300] sm:$0xff]
    %v563 = vld [vmem:[#allocation3 + $0x308] sm:$0xff]
    %v564 = vld [vmem:[#allocation3 + $0x310] sm:$0xff]
    %v565 = vld [vmem:[#allocation3 + $0x318] sm:$0xff]
    %v566 = vld [vmem:[#allocation3 + $0x320] sm:$0xff]
    %v567 = vld [vmem:[#allocation3 + $0x328] sm:$0xff]
    %v568 = vld [vmem:[#allocation3 + $0x330] sm:$0xff]
    %v569 = vld [vmem:[#allocation3 + $0x338] sm:$0xff]
    %v570 = vld [vmem:[#allocation3 + $0x340] sm:$0xff]
    %v571 = vld [vmem:[#allocation3 + $0x348] sm:$0xff]
    %v572 = vld [vmem:[#allocation3 + $0x350] sm:$0xff]
    %v573 = vld [vmem:[#allocation3 + $0x358] sm:$0xff]
    %v574 = vld [vmem:[#allocation3 + $0x360] sm:$0xff]
    %v575 = vld [vmem:[#allocation3 + $0x368] sm:$0xff]
    %v576 = vld [vmem:[#allocation3 + $0x370] sm:$0xff]
    %v577 = vld [vmem:[#allocation3 + $0x378] sm:$0xff]
    %v578 = vld [vmem:[#allocation3 + $0x380] sm:$0xff]
    %v579 = vld [vmem:[#allocation3 + $0x388] sm:$0xff]
    %v580 = vld [vmem:[#allocation3 + $0x390] sm:$0xff]
    %v581 = vld [vmem:[#allocation3 + $0x398] sm:$0xff]
    %v582 = vld [vmem:[#allocation3 + $0x3a0] sm:$0xff]
    %v583 = vld [vmem:[#allocation3 + $0x3a8] sm:$0xff]
    %v584 = vld [vmem:[#allocation3 + $0x3b0] sm:$0xff]
    %v585 = vld [vmem:[#allocation3 + $0x3b8] sm:$0xff]
    %v586 = vld [vmem:[#allocation3 + $0x3c0] sm:$0xff]
    %v587 = vld [vmem:[#allocation3 + $0x3c8] sm:$0xff]
    %v588 = vld [vmem:[#allocation3 + $0x3d0] sm:$0xff]
    %v589 = vld [vmem:[#allocation3 + $0x3d8] sm:$0xff]
    %v590 = vld [vmem:[#allocation3 + $0x3e0] sm:$0xff]
    %v591 = vld [vmem:[#allocation3 + $0x3e8] sm:$0xff]
    %v592 = vld [vmem:[#allocation3 + $0x3f0] sm:$0xff]
    %v593 = vld [vmem:[#allocation3 + $0x3f8] sm:$0xff]
    %v594 = vld [vmem:[#allocation3 + $0x400] sm:$0xff]
    %v595 = vld [vmem:[#allocation3 + $0x408] sm:$0xff]
    %v596 = vld [vmem:[#allocation3 + $0x410] sm:$0xff]
    %v597 = vld [vmem:[#allocation3 + $0x418] sm:$0xff]
    %v598 = vld [vmem:[#allocation3 + $0x420] sm:$0xff]
    %v599 = vld [vmem:[#allocation3 + $0x428] sm:$0xff]
    %v600 = vld [vmem:[#allocation3 + $0x430] sm:$0xff]
    %v601 = vld [vmem:[#allocation3 + $0x438] sm:$0xff]
    %v602 = vld [vmem:[#allocation3 + $0x440] sm:$0xff]
    %v603 = vld [vmem:[#allocation3 + $0x448] sm:$0xff]
    %v604 = vld [vmem:[#allocation3 + $0x450] sm:$0xff]
    %v605 = vld [vmem:[#allocation3 + $0x458] sm:$0xff]
    %v606 = vld [vmem:[#allocation3 + $0x460] sm:$0xff]
    %v607 = vld [vmem:[#allocation3 + $0x468] sm:$0xff]
    %v608 = vld [vmem:[#allocation3 + $0x470] sm:$0xff]
    %v609 = vld [vmem:[#allocation3 + $0x478] sm:$0xff]
    %v610 = vld [vmem:[#allocation3 + $0x480] sm:$0xff]
    %v611 = vld [vmem:[#allocation3 + $0x488] sm:$0xff]
    %v612 = vld [vmem:[#allocation3 + $0x490] sm:$0xff]
    %v613 = vld [vmem:[#allocation3 + $0x498] sm:$0xff]
    %v614 = vld [vmem:[#allocation3 + $0x4a0] sm:$0xff]
    %v615 = vld [vmem:[#allocation3 + $0x4a8] sm:$0xff]
    %v616 = vld [vmem:[#allocation3 + $0x4b0] sm:$0xff]
    %v617 = vld [vmem:[#allocation3 + $0x4b8] sm:$0xff]
    %v618 = vld [vmem:[#allocation3 + $0x4c0] sm:$0xff]
    %v619 = vld [vmem:[#allocation3 + $0x4c8] sm:$0xff]
    %v620 = vld [vmem:[#allocation3 + $0x4d0] sm:$0xff]
    %v621 = vld [vmem:[#allocation3 + $0x4d8] sm:$0xff]
    %v622 = vld [vmem:[#allocation3 + $0x4e0] sm:$0xff]
    %v623 = vld [vmem:[#allocation3 + $0x4e8] sm:$0xff]
    %v624 = vld [vmem:[#allocation3 + $0x4f0] sm:$0xff]
    %v625 = vld [vmem:[#allocation3 + $0x4f8] sm:$0xff]
    %v626 = vld [vmem:[#allocation3 + $0x500] sm:$0xff]
    %v627 = vld [vmem:[#allocation3 + $0x508] sm:$0xff]
    %v628 = vld [vmem:[#allocation3 + $0x510] sm:$0xff]
    %v629 = vld [vmem:[#allocation3 + $0x518] sm:$0xff]
    %v630 = vld [vmem:[#allocation3 + $0x520] sm:$0xff]
    %v631 = vld [vmem:[#allocation3 + $0x528] sm:$0xff]
    %v632 = vld [vmem:[#allocation3 + $0x530] sm:$0xff]
    %v633 = vld [vmem:[#allocation3 + $0x538] sm:$0xff]
    %v634 = vld [vmem:[#allocation3 + $0x540] sm:$0xff]
    %v635 = vld [vmem:[#allocation3 + $0x548] sm:$0xff]
    %v636 = vld [vmem:[#allocation3 + $0x550] sm:$0xff]
    %v637 = vld [vmem:[#allocation3 + $0x558] sm:$0xff]
    %v638 = vld [vmem:[#allocation3 + $0x560] sm:$0xff]
    %v639 = vld [vmem:[#allocation3 + $0x568] sm:$0xff]
    %v640 = vld [vmem:[#allocation3 + $0x570] sm:$0xff]
    %v641 = vld [vmem:[#allocation3 + $0x578] sm:$0xff]
    %v642 = vld [vmem:[#allocation3 + $0x580] sm:$0xff]
    %v643 = vld [vmem:[#allocation3 + $0x588] sm:$0xff]
    %v644 = vld [vmem:[#allocation3 + $0x590] sm:$0xff]
    %v645 = vld [vmem:[#allocation3 + $0x598] sm:$0xff]
    %v646 = vld [vmem:[#allocation3 + $0x5a0] sm:$0xff]
    %v647 = vld [vmem:[#allocation3 + $0x5a8] sm:$0xff]
    %v648 = vld [vmem:[#allocation3 + $0x5b0] sm:$0xff]
    %v649 = vld [vmem:[#allocation3 + $0x5b8] sm:$0xff]
    %v650 = vld [vmem:[#allocation3 + $0x5c0] sm:$0xff]
    %v651 = vld [vmem:[#allocation3 + $0x5c8] sm:$0xff]
    %v652 = vld [vmem:[#allocation3 + $0x5d0] sm:$0xff]
    %v653 = vld [vmem:[#allocation3 + $0x5d8] sm:$0xff]
    %v654 = vld [vmem:[#allocation3 + $0x5e0] sm:$0xff]
    %v655 = vld [vmem:[#allocation3 + $0x5e8] sm:$0xff]
    %v656 = vld [vmem:[#allocation3 + $0x5f0] sm:$0xff]
    %v657 = vld [vmem:[#allocation3 + $0x5f8] sm:$0xff]
    %v658 = vld [vmem:[#allocation3 + $0x600] sm:$0xff]
    %v659 = vld [vmem:[#allocation3 + $0x608] sm:$0xff]
    %v660 = vld [vmem:[#allocation3 + $0x610] sm:$0xff]
    %v661 = vld [vmem:[#allocation3 + $0x618] sm:$0xff]
    %v662 = vld [vmem:[#allocation3 + $0x620] sm:$0xff]
    %v663 = vld [vmem:[#allocation3 + $0x628] sm:$0xff]
    %v664 = vld [vmem:[#allocation3 + $0x630] sm:$0xff]
    %v665 = vld [vmem:[#allocation3 + $0x638] sm:$0xff]
    %v666 = vld [vmem:[#allocation3 + $0x640] sm:$0xff]
    %v667 = vld [vmem:[#allocation3 + $0x648] sm:$0xff]
    %v668 = vld [vmem:[#allocation3 + $0x650] sm:$0xff]
    %v669 = vld [vmem:[#allocation3 + $0x658] sm:$0xff]
    %v670 = vld [vmem:[#allocation3 + $0x660] sm:$0xff]
    %v671 = vld [vmem:[#allocation3 + $0x668] sm:$0xff]
    %v672 = vld [vmem:[#allocation3 + $0x670] sm:$0xff]
    %v673 = vld [vmem:[#allocation3 + $0x678] sm:$0xff]
    %v674 = vld [vmem:[#allocation3 + $0x680] sm:$0xff]
    %v675 = vld [vmem:[#allocation3 + $0x688] sm:$0xff]
    %v676 = vld [vmem:[#allocation3 + $0x690] sm:$0xff]
    %v677 = vld [vmem:[#allocation3 + $0x698] sm:$0xff]
    %v678 = vld [vmem:[#allocation3 + $0x6a0] sm:$0xff]
    %v679 = vld [vmem:[#allocation3 + $0x6a8] sm:$0xff]
    %v680 = vld [vmem:[#allocation3 + $0x6b0] sm:$0xff]
    %v681 = vld [vmem:[#allocation3 + $0x6b8] sm:$0xff]
    %v682 = vld [vmem:[#allocation3 + $0x6c0] sm:$0xff]
    %v683 = vld [vmem:[#allocation3 + $0x6c8] sm:$0xff]
    %v684 = vld [vmem:[#allocation3 + $0x6d0] sm:$0xff]
    %v685 = vld [vmem:[#allocation3 + $0x6d8] sm:$0xff]
    %v686 = vld [vmem:[#allocation3 + $0x6e0] sm:$0xff]
    %v687 = vld [vmem:[#allocation3 + $0x6e8] sm:$0xff]
    %v688 = vld [vmem:[#allocation3 + $0x6f0] sm:$0xff]
    %v689 = vld [vmem:[#allocation3 + $0x6f8] sm:$0xff]
    %v690 = vld [vmem:[#allocation3 + $0x700] sm:$0xff]
    %v691 = vld [vmem:[#allocation3 + $0x708] sm:$0xff]
    %v692 = vld [vmem:[#allocation3 + $0x710] sm:$0xff]
    %v693 = vld [vmem:[#allocation3 + $0x718] sm:$0xff]
    %v694 = vld [vmem:[#allocation3 + $0x720] sm:$0xff]
    %v695 = vld [vmem:[#allocation3 + $0x728] sm:$0xff]
    %v696 = vld [vmem:[#allocation3 + $0x730] sm:$0xff]
    %v697 = vld [vmem:[#allocation3 + $0x738] sm:$0xff]
    %v698 = vld [vmem:[#allocation3 + $0x740] sm:$0xff]
    %v699 = vld [vmem:[#allocation3 + $0x748] sm:$0xff]
    %v700 = vld [vmem:[#allocation3 + $0x750] sm:$0xff]
    %v701 = vld [vmem:[#allocation3 + $0x758] sm:$0xff]
    %v702 = vld [vmem:[#allocation3 + $0x760] sm:$0xff]
    %v703 = vld [vmem:[#allocation3 + $0x768] sm:$0xff]
    %v704 = vld [vmem:[#allocation3 + $0x770] sm:$0xff]
    %v705 = vld [vmem:[#allocation3 + $0x778] sm:$0xff]
    %v706 = vld [vmem:[#allocation3 + $0x780] sm:$0xff]
    %v707 = vld [vmem:[#allocation3 + $0x788] sm:$0xff]
    %v708 = vld [vmem:[#allocation3 + $0x790] sm:$0xff]
    %v709 = vld [vmem:[#allocation3 + $0x798] sm:$0xff]
    %v710 = vld [vmem:[#allocation3 + $0x7a0] sm:$0xff]
    %v711 = vld [vmem:[#allocation3 + $0x7a8] sm:$0xff]
    %v712 = vld [vmem:[#allocation3 + $0x7b0] sm:$0xff]
    %v713 = vld [vmem:[#allocation3 + $0x7b8] sm:$0xff]
    %v714 = vld [vmem:[#allocation3 + $0x7c0] sm:$0xff]
    %v715 = vld [vmem:[#allocation3 + $0x7c8] sm:$0xff]
    %v716 = vld [vmem:[#allocation3 + $0x7d0] sm:$0xff]
    %v717 = vld [vmem:[#allocation3 + $0x7d8] sm:$0xff]
    %v718 = vld [vmem:[#allocation3 + $0x7e0] sm:$0xff]
    %v719 = vld [vmem:[#allocation3 + $0x7e8] sm:$0xff]
    %v720 = vld [vmem:[#allocation3 + $0x7f0] sm:$0xff]
    %v721 = vld [vmem:[#allocation3 + $0x7f8] sm:$0xff]
    %v978 = vunpack.c.l.b16 %v466
    %v979 = vunpack.c.h.b16 %v466
    %v980 = vunpack.c.l.b16 %v467
    %v981 = vunpack.c.h.b16 %v467
    %v982 = vunpack.c.l.b16 %v468
    %v983 = vunpack.c.h.b16 %v468
    %v984 = vunpack.c.l.b16 %v469
    %v985 = vunpack.c.h.b16 %v469
    %v986 = vunpack.c.l.b16 %v470
    %v987 = vunpack.c.h.b16 %v470
    %v988 = vunpack.c.l.b16 %v471
    %v989 = vunpack.c.h.b16 %v471
    %v990 = vunpack.c.l.b16 %v472
    %v991 = vunpack.c.h.b16 %v472
    %v992 = vunpack.c.l.b16 %v473
    %v993 = vunpack.c.h.b16 %v473
    %v994 = vunpack.c.l.b16 %v474
    %v995 = vunpack.c.h.b16 %v474
    %v996 = vunpack.c.l.b16 %v475
    %v997 = vunpack.c.h.b16 %v475
    %v998 = vunpack.c.l.b16 %v476
    %v999 = vunpack.c.h.b16 %v476
    %v1000 = vunpack.c.l.b16 %v477
    %v1001 = vunpack.c.h.b16 %v477
    %v1002 = vunpack.c.l.b16 %v478
    %v1003 = vunpack.c.h.b16 %v478
    %v1004 = vunpack.c.l.b16 %v479
    %v1005 = vunpack.c.h.b16 %v479
    %v1006 = vunpack.c.l.b16 %v480
    %v1007 = vunpack.c.h.b16 %v480
    %v1008 = vunpack.c.l.b16 %v481
    %v1009 = vunpack.c.h.b16 %v481
    %v1010 = vunpack.c.l.b16 %v482
    %v1011 = vunpack.c.h.b16 %v482
    %v1012 = vunpack.c.l.b16 %v483
    %v1013 = vunpack.c.h.b16 %v483
    %v1014 = vunpack.c.l.b16 %v484
    %v1015 = vunpack.c.h.b16 %v484
    %v1016 = vunpack.c.l.b16 %v485
    %v1017 = vunpack.c.h.b16 %v485
    %v1018 = vunpack.c.l.b16 %v486
    %v1019 = vunpack.c.h.b16 %v486
    %v1020 = vunpack.c.l.b16 %v487
    %v1021 = vunpack.c.h.b16 %v487
    %v1022 = vunpack.c.l.b16 %v488
    %v1023 = vunpack.c.h.b16 %v488
    %v1024 = vunpack.c.l.b16 %v489
    %v1025 = vunpack.c.h.b16 %v489
    %v1026 = vunpack.c.l.b16 %v490
    %v1027 = vunpack.c.h.b16 %v490
    %v1028 = vunpack.c.l.b16 %v491
    %v1029 = vunpack.c.h.b16 %v491
    %v1030 = vunpack.c.l.b16 %v492
    %v1031 = vunpack.c.h.b16 %v492
    %v1032 = vunpack.c.l.b16 %v493
    %v1033 = vunpack.c.h.b16 %v493
    %v1034 = vunpack.c.l.b16 %v494
    %v1035 = vunpack.c.h.b16 %v494
    %v1036 = vunpack.c.l.b16 %v495
    %v1037 = vunpack.c.h.b16 %v495
    %v1038 = vunpack.c.l.b16 %v496
    %v1039 = vunpack.c.h.b16 %v496
    %v1040 = vunpack.c.l.b16 %v497
    %v1041 = vunpack.c.h.b16 %v497
    %v1042 = vunpack.c.l.b16 %v498
    %v1043 = vunpack.c.h.b16 %v498
    %v1044 = vunpack.c.l.b16 %v499
    %v1045 = vunpack.c.h.b16 %v499
    %v1046 = vunpack.c.l.b16 %v500
    %v1047 = vunpack.c.h.b16 %v500
    %v1048 = vunpack.c.l.b16 %v501
    %v1049 = vunpack.c.h.b16 %v501
    %v1050 = vunpack.c.l.b16 %v502
    %v1051 = vunpack.c.h.b16 %v502
    %v1052 = vunpack.c.l.b16 %v503
    %v1053 = vunpack.c.h.b16 %v503
    %v1054 = vunpack.c.l.b16 %v504
    %v1055 = vunpack.c.h.b16 %v504
    %v1056 = vunpack.c.l.b16 %v505
    %v1057 = vunpack.c.h.b16 %v505
    %v1058 = vunpack.c.l.b16 %v506
    %v1059 = vunpack.c.h.b16 %v506
    %v1060 = vunpack.c.l.b16 %v507
    %v1061 = vunpack.c.h.b16 %v507
    %v1062 = vunpack.c.l.b16 %v508
    %v1063 = vunpack.c.h.b16 %v508
    %v1064 = vunpack.c.l.b16 %v509
    %v1065 = vunpack.c.h.b16 %v509
    %v1066 = vunpack.c.l.b16 %v510
    %v1067 = vunpack.c.h.b16 %v510
    %v1068 = vunpack.c.l.b16 %v511
    %v1069 = vunpack.c.h.b16 %v511
    %v1070 = vunpack.c.l.b16 %v512
    %v1071 = vunpack.c.h.b16 %v512
    %v1072 = vunpack.c.l.b16 %v513
    %v1073 = vunpack.c.h.b16 %v513
    %v1074 = vunpack.c.l.b16 %v514
    %v1075 = vunpack.c.h.b16 %v514
    %v1076 = vunpack.c.l.b16 %v515
    %v1077 = vunpack.c.h.b16 %v515
    %v1078 = vunpack.c.l.b16 %v516
    %v1079 = vunpack.c.h.b16 %v516
    %v1080 = vunpack.c.l.b16 %v517
    %v1081 = vunpack.c.h.b16 %v517
    %v1082 = vunpack.c.l.b16 %v518
    %v1083 = vunpack.c.h.b16 %v518
    %v1084 = vunpack.c.l.b16 %v519
    %v1085 = vunpack.c.h.b16 %v519
    %v1086 = vunpack.c.l.b16 %v520
    %v1087 = vunpack.c.h.b16 %v520
    %v1088 = vunpack.c.l.b16 %v521
    %v1089 = vunpack.c.h.b16 %v521
    %v1090 = vunpack.c.l.b16 %v522
    %v1091 = vunpack.c.h.b16 %v522
    %v1092 = vunpack.c.l.b16 %v523
    %v1093 = vunpack.c.h.b16 %v523
    %v1094 = vunpack.c.l.b16 %v524
    %v1095 = vunpack.c.h.b16 %v524
    %v1096 = vunpack.c.l.b16 %v525
    %v1097 = vunpack.c.h.b16 %v525
    %v1098 = vunpack.c.l.b16 %v526
    %v1099 = vunpack.c.h.b16 %v526
    %v1100 = vunpack.c.l.b16 %v527
    %v1101 = vunpack.c.h.b16 %v527
    %v1102 = vunpack.c.l.b16 %v528
    %v1103 = vunpack.c.h.b16 %v528
    %v1104 = vunpack.c.l.b16 %v529
    %v1105 = vunpack.c.h.b16 %v529
    %v1106 = vunpack.c.l.b16 %v530
    %v1107 = vunpack.c.h.b16 %v530
    %v1108 = vunpack.c.l.b16 %v531
    %v1109 = vunpack.c.h.b16 %v531
    %v1110 = vunpack.c.l.b16 %v532
    %v1111 = vunpack.c.h.b16 %v532
    %v1112 = vunpack.c.l.b16 %v533
    %v1113 = vunpack.c.h.b16 %v533
    %v1114 = vunpack.c.l.b16 %v534
    %v1115 = vunpack.c.h.b16 %v534
    %v1116 = vunpack.c.l.b16 %v535
    %v1117 = vunpack.c.h.b16 %v535
    %v1118 = vunpack.c.l.b16 %v536
    %v1119 = vunpack.c.h.b16 %v536
    %v1120 = vunpack.c.l.b16 %v537
    %v1121 = vunpack.c.h.b16 %v537
    %v1122 = vunpack.c.l.b16 %v538
    %v1123 = vunpack.c.h.b16 %v538
    %v1124 = vunpack.c.l.b16 %v539
    %v1125 = vunpack.c.h.b16 %v539
    %v1126 = vunpack.c.l.b16 %v540
    %v1127 = vunpack.c.h.b16 %v540
    %v1128 = vunpack.c.l.b16 %v541
    %v1129 = vunpack.c.h.b16 %v541
    %v1130 = vunpack.c.l.b16 %v542
    %v1131 = vunpack.c.h.b16 %v542
    %v1132 = vunpack.c.l.b16 %v543
    %v1133 = vunpack.c.h.b16 %v543
    %v1134 = vunpack.c.l.b16 %v544
    %v1135 = vunpack.c.h.b16 %v544
    %v1136 = vunpack.c.l.b16 %v545
    %v1137 = vunpack.c.h.b16 %v545
    %v1138 = vunpack.c.l.b16 %v546
    %v1139 = vunpack.c.h.b16 %v546
    %v1140 = vunpack.c.l.b16 %v547
    %v1141 = vunpack.c.h.b16 %v547
    %v1142 = vunpack.c.l.b16 %v548
    %v1143 = vunpack.c.h.b16 %v548
    %v1144 = vunpack.c.l.b16 %v549
    %v1145 = vunpack.c.h.b16 %v549
    %v1146 = vunpack.c.l.b16 %v550
    %v1147 = vunpack.c.h.b16 %v550
    %v1148 = vunpack.c.l.b16 %v551
    %v1149 = vunpack.c.h.b16 %v551
    %v1150 = vunpack.c.l.b16 %v552
    %v1151 = vunpack.c.h.b16 %v552
    %v1152 = vunpack.c.l.b16 %v553
    %v1153 = vunpack.c.h.b16 %v553
    %v1154 = vunpack.c.l.b16 %v554
    %v1155 = vunpack.c.h.b16 %v554
    %v1156 = vunpack.c.l.b16 %v555
    %v1157 = vunpack.c.h.b16 %v555
    %v1158 = vunpack.c.l.b16 %v556
    %v1159 = vunpack.c.h.b16 %v556
    %v1160 = vunpack.c.l.b16 %v557
    %v1161 = vunpack.c.h.b16 %v557
    %v1162 = vunpack.c.l.b16 %v558
    %v1163 = vunpack.c.h.b16 %v558
    %v1164 = vunpack.c.l.b16 %v559
    %v1165 = vunpack.c.h.b16 %v559
    %v1166 = vunpack.c.l.b16 %v560
    %v1167 = vunpack.c.h.b16 %v560
    %v1168 = vunpack.c.l.b16 %v561
    %v1169 = vunpack.c.h.b16 %v561
    %v1170 = vunpack.c.l.b16 %v562
    %v1171 = vunpack.c.h.b16 %v562
    %v1172 = vunpack.c.l.b16 %v563
    %v1173 = vunpack.c.h.b16 %v563
    %v1174 = vunpack.c.l.b16 %v564
    %v1175 = vunpack.c.h.b16 %v564
    %v1176 = vunpack.c.l.b16 %v565
    %v1177 = vunpack.c.h.b16 %v565
    %v1178 = vunpack.c.l.b16 %v566
    %v1179 = vunpack.c.h.b16 %v566
    %v1180 = vunpack.c.l.b16 %v567
    %v1181 = vunpack.c.h.b16 %v567
    %v1182 = vunpack.c.l.b16 %v568
    %v1183 = vunpack.c.h.b16 %v568
    %v1184 = vunpack.c.l.b16 %v569
    %v1185 = vunpack.c.h.b16 %v569
    %v1186 = vunpack.c.l.b16 %v570
    %v1187 = vunpack.c.h.b16 %v570
    %v1188 = vunpack.c.l.b16 %v571
    %v1189 = vunpack.c.h.b16 %v571
    %v1190 = vunpack.c.l.b16 %v572
    %v1191 = vunpack.c.h.b16 %v572
    %v1192 = vunpack.c.l.b16 %v573
    %v1193 = vunpack.c.h.b16 %v573
    %v1194 = vunpack.c.l.b16 %v574
    %v1195 = vunpack.c.h.b16 %v574
    %v1196 = vunpack.c.l.b16 %v575
    %v1197 = vunpack.c.h.b16 %v575
    %v1198 = vunpack.c.l.b16 %v576
    %v1199 = vunpack.c.h.b16 %v576
    %v1200 = vunpack.c.l.b16 %v577
    %v1201 = vunpack.c.h.b16 %v577
    %v1202 = vunpack.c.l.b16 %v578
    %v1203 = vunpack.c.h.b16 %v578
    %v1204 = vunpack.c.l.b16 %v579
    %v1205 = vunpack.c.h.b16 %v579
    %v1206 = vunpack.c.l.b16 %v580
    %v1207 = vunpack.c.h.b16 %v580
    %v1208 = vunpack.c.l.b16 %v581
    %v1209 = vunpack.c.h.b16 %v581
    %v1210 = vunpack.c.l.b16 %v582
    %v1211 = vunpack.c.h.b16 %v582
    %v1212 = vunpack.c.l.b16 %v583
    %v1213 = vunpack.c.h.b16 %v583
    %v1214 = vunpack.c.l.b16 %v584
    %v1215 = vunpack.c.h.b16 %v584
    %v1216 = vunpack.c.l.b16 %v585
    %v1217 = vunpack.c.h.b16 %v585
    %v1218 = vunpack.c.l.b16 %v586
    %v1219 = vunpack.c.h.b16 %v586
    %v1220 = vunpack.c.l.b16 %v587
    %v1221 = vunpack.c.h.b16 %v587
    %v1222 = vunpack.c.l.b16 %v588
    %v1223 = vunpack.c.h.b16 %v588
    %v1224 = vunpack.c.l.b16 %v589
    %v1225 = vunpack.c.h.b16 %v589
    %v1226 = vunpack.c.l.b16 %v590
    %v1227 = vunpack.c.h.b16 %v590
    %v1228 = vunpack.c.l.b16 %v591
    %v1229 = vunpack.c.h.b16 %v591
    %v1230 = vunpack.c.l.b16 %v592
    %v1231 = vunpack.c.h.b16 %v592
    %v1232 = vunpack.c.l.b16 %v593
    %v1233 = vunpack.c.h.b16 %v593
    %v1234 = vunpack.c.l.b16 %v594
    %v1235 = vunpack.c.h.b16 %v594
    %v1236 = vunpack.c.l.b16 %v595
    %v1237 = vunpack.c.h.b16 %v595
    %v1238 = vunpack.c.l.b16 %v596
    %v1239 = vunpack.c.h.b16 %v596
    %v1240 = vunpack.c.l.b16 %v597
    %v1241 = vunpack.c.h.b16 %v597
    %v1242 = vunpack.c.l.b16 %v598
    %v1243 = vunpack.c.h.b16 %v598
    %v1244 = vunpack.c.l.b16 %v599
    %v1245 = vunpack.c.h.b16 %v599
    %v1246 = vunpack.c.l.b16 %v600
    %v1247 = vunpack.c.h.b16 %v600
    %v1248 = vunpack.c.l.b16 %v601
    %v1249 = vunpack.c.h.b16 %v601
    %v1250 = vunpack.c.l.b16 %v602
    %v1251 = vunpack.c.h.b16 %v602
    %v1252 = vunpack.c.l.b16 %v603
    %v1253 = vunpack.c.h.b16 %v603
    %v1254 = vunpack.c.l.b16 %v604
    %v1255 = vunpack.c.h.b16 %v604
    %v1256 = vunpack.c.l.b16 %v605
    %v1257 = vunpack.c.h.b16 %v605
    %v1258 = vunpack.c.l.b16 %v606
    %v1259 = vunpack.c.h.b16 %v606
    %v1260 = vunpack.c.l.b16 %v607
    %v1261 = vunpack.c.h.b16 %v607
    %v1262 = vunpack.c.l.b16 %v608
    %v1263 = vunpack.c.h.b16 %v608
    %v1264 = vunpack.c.l.b16 %v609
    %v1265 = vunpack.c.h.b16 %v609
    %v1266 = vunpack.c.l.b16 %v610
    %v1267 = vunpack.c.h.b16 %v610
    %v1268 = vunpack.c.l.b16 %v611
    %v1269 = vunpack.c.h.b16 %v611
    %v1270 = vunpack.c.l.b16 %v612
    %v1271 = vunpack.c.h.b16 %v612
    %v1272 = vunpack.c.l.b16 %v613
    %v1273 = vunpack.c.h.b16 %v613
    %v1274 = vunpack.c.l.b16 %v614
    %v1275 = vunpack.c.h.b16 %v614
    %v1276 = vunpack.c.l.b16 %v615
    %v1277 = vunpack.c.h.b16 %v615
    %v1278 = vunpack.c.l.b16 %v616
    %v1279 = vunpack.c.h.b16 %v616
    %v1280 = vunpack.c.l.b16 %v617
    %v1281 = vunpack.c.h.b16 %v617
    %v1282 = vunpack.c.l.b16 %v618
    %v1283 = vunpack.c.h.b16 %v618
    %v1284 = vunpack.c.l.b16 %v619
    %v1285 = vunpack.c.h.b16 %v619
    %v1286 = vunpack.c.l.b16 %v620
    %v1287 = vunpack.c.h.b16 %v620
    %v1288 = vunpack.c.l.b16 %v621
    %v1289 = vunpack.c.h.b16 %v621
    %v1290 = vunpack.c.l.b16 %v622
    %v1291 = vunpack.c.h.b16 %v622
    %v1292 = vunpack.c.l.b16 %v623
    %v1293 = vunpack.c.h.b16 %v623
    %v1294 = vunpack.c.l.b16 %v624
    %v1295 = vunpack.c.h.b16 %v624
    %v1296 = vunpack.c.l.b16 %v625
    %v1297 = vunpack.c.h.b16 %v625
    %v1298 = vunpack.c.l.b16 %v626
    %v1299 = vunpack.c.h.b16 %v626
    %v1300 = vunpack.c.l.b16 %v627
    %v1301 = vunpack.c.h.b16 %v627
    %v1302 = vunpack.c.l.b16 %v628
    %v1303 = vunpack.c.h.b16 %v628
    %v1304 = vunpack.c.l.b16 %v629
    %v1305 = vunpack.c.h.b16 %v629
    %v1306 = vunpack.c.l.b16 %v630
    %v1307 = vunpack.c.h.b16 %v630
    %v1308 = vunpack.c.l.b16 %v631
    %v1309 = vunpack.c.h.b16 %v631
    %v1310 = vunpack.c.l.b16 %v632
    %v1311 = vunpack.c.h.b16 %v632
    %v1312 = vunpack.c.l.b16 %v633
    %v1313 = vunpack.c.h.b16 %v633
    %v1314 = vunpack.c.l.b16 %v634
    %v1315 = vunpack.c.h.b16 %v634
    %v1316 = vunpack.c.l.b16 %v635
    %v1317 = vunpack.c.h.b16 %v635
    %v1318 = vunpack.c.l.b16 %v636
    %v1319 = vunpack.c.h.b16 %v636
    %v1320 = vunpack.c.l.b16 %v637
    %v1321 = vunpack.c.h.b16 %v637
    %v1322 = vunpack.c.l.b16 %v638
    %v1323 = vunpack.c.h.b16 %v638
    %v1324 = vunpack.c.l.b16 %v639
    %v1325 = vunpack.c.h.b16 %v639
    %v1326 = vunpack.c.l.b16 %v640
    %v1327 = vunpack.c.h.b16 %v640
    %v1328 = vunpack.c.l.b16 %v641
    %v1329 = vunpack.c.h.b16 %v641
    %v1330 = vunpack.c.l.b16 %v642
    %v1331 = vunpack.c.h.b16 %v642
    %v1332 = vunpack.c.l.b16 %v643
    %v1333 = vunpack.c.h.b16 %v643
    %v1334 = vunpack.c.l.b16 %v644
    %v1335 = vunpack.c.h.b16 %v644
    %v1336 = vunpack.c.l.b16 %v645
    %v1337 = vunpack.c.h.b16 %v645
    %v1338 = vunpack.c.l.b16 %v646
    %v1339 = vunpack.c.h.b16 %v646
    %v1340 = vunpack.c.l.b16 %v647
    %v1341 = vunpack.c.h.b16 %v647
    %v1342 = vunpack.c.l.b16 %v648
    %v1343 = vunpack.c.h.b16 %v648
    %v1344 = vunpack.c.l.b16 %v649
    %v1345 = vunpack.c.h.b16 %v649
    %v1346 = vunpack.c.l.b16 %v650
    %v1347 = vunpack.c.h.b16 %v650
    %v1348 = vunpack.c.l.b16 %v651
    %v1349 = vunpack.c.h.b16 %v651
    %v1350 = vunpack.c.l.b16 %v652
    %v1351 = vunpack.c.h.b16 %v652
    %v1352 = vunpack.c.l.b16 %v653
    %v1353 = vunpack.c.h.b16 %v653
    %v1354 = vunpack.c.l.b16 %v654
    %v1355 = vunpack.c.h.b16 %v654
    %v1356 = vunpack.c.l.b16 %v655
    %v1357 = vunpack.c.h.b16 %v655
    %v1358 = vunpack.c.l.b16 %v656
    %v1359 = vunpack.c.h.b16 %v656
    %v1360 = vunpack.c.l.b16 %v657
    %v1361 = vunpack.c.h.b16 %v657
    %v1362 = vunpack.c.l.b16 %v658
    %v1363 = vunpack.c.h.b16 %v658
    %v1364 = vunpack.c.l.b16 %v659
    %v1365 = vunpack.c.h.b16 %v659
    %v1366 = vunpack.c.l.b16 %v660
    %v1367 = vunpack.c.h.b16 %v660
    %v1368 = vunpack.c.l.b16 %v661
    %v1369 = vunpack.c.h.b16 %v661
    %v1370 = vunpack.c.l.b16 %v662
    %v1371 = vunpack.c.h.b16 %v662
    %v1372 = vunpack.c.l.b16 %v663
    %v1373 = vunpack.c.h.b16 %v663
    %v1374 = vunpack.c.l.b16 %v664
    %v1375 = vunpack.c.h.b16 %v664
    %v1376 = vunpack.c.l.b16 %v665
    %v1377 = vunpack.c.h.b16 %v665
    %v1378 = vunpack.c.l.b16 %v666
    %v1379 = vunpack.c.h.b16 %v666
    %v1380 = vunpack.c.l.b16 %v667
    %v1381 = vunpack.c.h.b16 %v667
    %v1382 = vunpack.c.l.b16 %v668
    %v1383 = vunpack.c.h.b16 %v668
    %v1384 = vunpack.c.l.b16 %v669
    %v1385 = vunpack.c.h.b16 %v669
    %v1386 = vunpack.c.l.b16 %v670
    %v1387 = vunpack.c.h.b16 %v670
    %v1388 = vunpack.c.l.b16 %v671
    %v1389 = vunpack.c.h.b16 %v671
    %v1390 = vunpack.c.l.b16 %v672
    %v1391 = vunpack.c.h.b16 %v672
    %v1392 = vunpack.c.l.b16 %v673
    %v1393 = vunpack.c.h.b16 %v673
    %v1394 = vunpack.c.l.b16 %v674
    %v1395 = vunpack.c.h.b16 %v674
    %v1396 = vunpack.c.l.b16 %v675
    %v1397 = vunpack.c.h.b16 %v675
    %v1398 = vunpack.c.l.b16 %v676
    %v1399 = vunpack.c.h.b16 %v676
    %v1400 = vunpack.c.l.b16 %v677
    %v1401 = vunpack.c.h.b16 %v677
    %v1402 = vunpack.c.l.b16 %v678
    %v1403 = vunpack.c.h.b16 %v678
    %v1404 = vunpack.c.l.b16 %v679
    %v1405 = vunpack.c.h.b16 %v679
    %v1406 = vunpack.c.l.b16 %v680
    %v1407 = vunpack.c.h.b16 %v680
    %v1408 = vunpack.c.l.b16 %v681
    %v1409 = vunpack.c.h.b16 %v681
    %v1410 = vunpack.c.l.b16 %v682
    %v1411 = vunpack.c.h.b16 %v682
    %v1412 = vunpack.c.l.b16 %v683
    %v1413 = vunpack.c.h.b16 %v683
    %v1414 = vunpack.c.l.b16 %v684
    %v1415 = vunpack.c.h.b16 %v684
    %v1416 = vunpack.c.l.b16 %v685
    %v1417 = vunpack.c.h.b16 %v685
    %v1418 = vunpack.c.l.b16 %v686
    %v1419 = vunpack.c.h.b16 %v686
    %v1420 = vunpack.c.l.b16 %v687
    %v1421 = vunpack.c.h.b16 %v687
    %v1422 = vunpack.c.l.b16 %v688
    %v1423 = vunpack.c.h.b16 %v688
    %v1424 = vunpack.c.l.b16 %v689
    %v1425 = vunpack.c.h.b16 %v689
    %v1426 = vunpack.c.l.b16 %v690
    %v1427 = vunpack.c.h.b16 %v690
    %v1428 = vunpack.c.l.b16 %v691
    %v1429 = vunpack.c.h.b16 %v691
    %v1430 = vunpack.c.l.b16 %v692
    %v1431 = vunpack.c.h.b16 %v692
    %v1432 = vunpack.c.l.b16 %v693
    %v1433 = vunpack.c.h.b16 %v693
    %v1434 = vunpack.c.l.b16 %v694
    %v1435 = vunpack.c.h.b16 %v694
    %v1436 = vunpack.c.l.b16 %v695
    %v1437 = vunpack.c.h.b16 %v695
    %v1438 = vunpack.c.l.b16 %v696
    %v1439 = vunpack.c.h.b16 %v696
    %v1440 = vunpack.c.l.b16 %v697
    %v1441 = vunpack.c.h.b16 %v697
    %v1442 = vunpack.c.l.b16 %v698
    %v1443 = vunpack.c.h.b16 %v698
    %v1444 = vunpack.c.l.b16 %v699
    %v1445 = vunpack.c.h.b16 %v699
    %v1446 = vunpack.c.l.b16 %v700
    %v1447 = vunpack.c.h.b16 %v700
    %v1448 = vunpack.c.l.b16 %v701
    %v1449 = vunpack.c.h.b16 %v701
    %v1450 = vunpack.c.l.b16 %v702
    %v1451 = vunpack.c.h.b16 %v702
    %v1452 = vunpack.c.l.b16 %v703
    %v1453 = vunpack.c.h.b16 %v703
    %v1454 = vunpack.c.l.b16 %v704
    %v1455 = vunpack.c.h.b16 %v704
    %v1456 = vunpack.c.l.b16 %v705
    %v1457 = vunpack.c.h.b16 %v705
    %v1458 = vunpack.c.l.b16 %v706
    %v1459 = vunpack.c.h.b16 %v706
    %v1460 = vunpack.c.l.b16 %v707
    %v1461 = vunpack.c.h.b16 %v707
    %v1462 = vunpack.c.l.b16 %v708
    %v1463 = vunpack.c.h.b16 %v708
    %v1464 = vunpack.c.l.b16 %v709
    %v1465 = vunpack.c.h.b16 %v709
    %v1466 = vunpack.c.l.b16 %v710
    %v1467 = vunpack.c.h.b16 %v710
    %v1468 = vunpack.c.l.b16 %v711
    %v1469 = vunpack.c.h.b16 %v711
    %v1470 = vunpack.c.l.b16 %v712
    %v1471 = vunpack.c.h.b16 %v712
    %v1472 = vunpack.c.l.b16 %v713
    %v1473 = vunpack.c.h.b16 %v713
    %v1474 = vunpack.c.l.b16 %v714
    %v1475 = vunpack.c.h.b16 %v714
    %v1476 = vunpack.c.l.b16 %v715
    %v1477 = vunpack.c.h.b16 %v715
    %v1478 = vunpack.c.l.b16 %v716
    %v1479 = vunpack.c.h.b16 %v716
    %v1480 = vunpack.c.l.b16 %v717
    %v1481 = vunpack.c.h.b16 %v717
    %v1482 = vunpack.c.l.b16 %v718
    %v1483 = vunpack.c.h.b16 %v718
    %v1484 = vunpack.c.l.b16 %v719
    %v1485 = vunpack.c.h.b16 %v719
    %v1486 = vunpack.c.l.b16 %v720
    %v1487 = vunpack.c.h.b16 %v720
    %v1488 = vunpack.c.l.b16 %v721
    %v1489 = vunpack.c.h.b16 %v721
    %v1490 = vpack.c.b16 %v982, %v978
    %v1491 = vpack.c.b16 %v983, %v979
    %v1492 = vpack.c.b16 %v984, %v980
    %v1493 = vpack.c.b16 %v985, %v981
    %v1494 = vpack.c.b16 %v990, %v986
    %v1495 = vpack.c.b16 %v991, %v987
    %v1496 = vpack.c.b16 %v992, %v988
    %v1497 = vpack.c.b16 %v993, %v989
    %v1498 = vpack.c.b16 %v998, %v994
    %v1499 = vpack.c.b16 %v999, %v995
    %v1500 = vpack.c.b16 %v1000, %v996
    %v1501 = vpack.c.b16 %v1001, %v997
    %v1502 = vpack.c.b16 %v1006, %v1002
    %v1503 = vpack.c.b16 %v1007, %v1003
    %v1504 = vpack.c.b16 %v1008, %v1004
    %v1505 = vpack.c.b16 %v1009, %v1005
    %v1506 = vpack.c.b16 %v1014, %v1010
    %v1507 = vpack.c.b16 %v1015, %v1011
    %v1508 = vpack.c.b16 %v1016, %v1012
    %v1509 = vpack.c.b16 %v1017, %v1013
    %v1510 = vpack.c.b16 %v1022, %v1018
    %v1511 = vpack.c.b16 %v1023, %v1019
    %v1512 = vpack.c.b16 %v1024, %v1020
    %v1513 = vpack.c.b16 %v1025, %v1021
    %v1514 = vpack.c.b16 %v1030, %v1026
    %v1515 = vpack.c.b16 %v1031, %v1027
    %v1516 = vpack.c.b16 %v1032, %v1028
    %v1517 = vpack.c.b16 %v1033, %v1029
    %v1518 = vpack.c.b16 %v1038, %v1034
    %v1519 = vpack.c.b16 %v1039, %v1035
    %v1520 = vpack.c.b16 %v1040, %v1036
    %v1521 = vpack.c.b16 %v1041, %v1037
    %v1522 = vpack.c.b16 %v1046, %v1042
    %v1523 = vpack.c.b16 %v1047, %v1043
    %v1524 = vpack.c.b16 %v1048, %v1044
    %v1525 = vpack.c.b16 %v1049, %v1045
    %v1526 = vpack.c.b16 %v1054, %v1050
    %v1527 = vpack.c.b16 %v1055, %v1051
    %v1528 = vpack.c.b16 %v1056, %v1052
    %v1529 = vpack.c.b16 %v1057, %v1053
    %v1530 = vpack.c.b16 %v1062, %v1058
    %v1531 = vpack.c.b16 %v1063, %v1059
    %v1532 = vpack.c.b16 %v1064, %v1060
    %v1533 = vpack.c.b16 %v1065, %v1061
    %v1534 = vpack.c.b16 %v1070, %v1066
    %v1535 = vpack.c.b16 %v1071, %v1067
    %v1536 = vpack.c.b16 %v1072, %v1068
    %v1537 = vpack.c.b16 %v1073, %v1069
    %v1538 = vpack.c.b16 %v1078, %v1074
    %v1539 = vpack.c.b16 %v1079, %v1075
    %v1540 = vpack.c.b16 %v1080, %v1076
    %v1541 = vpack.c.b16 %v1081, %v1077
    %v1542 = vpack.c.b16 %v1086, %v1082
    %v1543 = vpack.c.b16 %v1087, %v1083
    %v1544 = vpack.c.b16 %v1088, %v1084
    %v1545 = vpack.c.b16 %v1089, %v1085
    %v1546 = vpack.c.b16 %v1094, %v1090
    %v1547 = vpack.c.b16 %v1095, %v1091
    %v1548 = vpack.c.b16 %v1096, %v1092
    %v1549 = vpack.c.b16 %v1097, %v1093
    %v1550 = vpack.c.b16 %v1102, %v1098
    %v1551 = vpack.c.b16 %v1103, %v1099
    %v1552 = vpack.c.b16 %v1104, %v1100
    %v1553 = vpack.c.b16 %v1105, %v1101
    %v1554 = vpack.c.b16 %v1110, %v1106
    %v1555 = vpack.c.b16 %v1111, %v1107
    %v1556 = vpack.c.b16 %v1112, %v1108
    %v1557 = vpack.c.b16 %v1113, %v1109
    %v1558 = vpack.c.b16 %v1118, %v1114
    %v1559 = vpack.c.b16 %v1119, %v1115
    %v1560 = vpack.c.b16 %v1120, %v1116
    %v1561 = vpack.c.b16 %v1121, %v1117
    %v1562 = vpack.c.b16 %v1126, %v1122
    %v1563 = vpack.c.b16 %v1127, %v1123
    %v1564 = vpack.c.b16 %v1128, %v1124
    %v1565 = vpack.c.b16 %v1129, %v1125
    %v1566 = vpack.c.b16 %v1134, %v1130
    %v1567 = vpack.c.b16 %v1135, %v1131
    %v1568 = vpack.c.b16 %v1136, %v1132
    %v1569 = vpack.c.b16 %v1137, %v1133
    %v1570 = vpack.c.b16 %v1142, %v1138
    %v1571 = vpack.c.b16 %v1143, %v1139
    %v1572 = vpack.c.b16 %v1144, %v1140
    %v1573 = vpack.c.b16 %v1145, %v1141
    %v1574 = vpack.c.b16 %v1150, %v1146
    %v1575 = vpack.c.b16 %v1151, %v1147
    %v1576 = vpack.c.b16 %v1152, %v1148
    %v1577 = vpack.c.b16 %v1153, %v1149
    %v1578 = vpack.c.b16 %v1158, %v1154
    %v1579 = vpack.c.b16 %v1159, %v1155
    %v1580 = vpack.c.b16 %v1160, %v1156
    %v1581 = vpack.c.b16 %v1161, %v1157
    %v1582 = vpack.c.b16 %v1166, %v1162
    %v1583 = vpack.c.b16 %v1167, %v1163
    %v1584 = vpack.c.b16 %v1168, %v1164
    %v1585 = vpack.c.b16 %v1169, %v1165
    %v1586 = vpack.c.b16 %v1174, %v1170
    %v1587 = vpack.c.b16 %v1175, %v1171
    %v1588 = vpack.c.b16 %v1176, %v1172
    %v1589 = vpack.c.b16 %v1177, %v1173
    %v1590 = vpack.c.b16 %v1182, %v1178
    %v1591 = vpack.c.b16 %v1183, %v1179
    %v1592 = vpack.c.b16 %v1184, %v1180
    %v1593 = vpack.c.b16 %v1185, %v1181
    %v1594 = vpack.c.b16 %v1190, %v1186
    %v1595 = vpack.c.b16 %v1191, %v1187
    %v1596 = vpack.c.b16 %v1192, %v1188
    %v1597 = vpack.c.b16 %v1193, %v1189
    %v1598 = vpack.c.b16 %v1198, %v1194
    %v1599 = vpack.c.b16 %v1199, %v1195
    %v1600 = vpack.c.b16 %v1200, %v1196
    %v1601 = vpack.c.b16 %v1201, %v1197
    %v1602 = vpack.c.b16 %v1206, %v1202
    %v1603 = vpack.c.b16 %v1207, %v1203
    %v1604 = vpack.c.b16 %v1208, %v1204
    %v1605 = vpack.c.b16 %v1209, %v1205
    %v1606 = vpack.c.b16 %v1214, %v1210
    %v1607 = vpack.c.b16 %v1215, %v1211
    %v1608 = vpack.c.b16 %v1216, %v1212
    %v1609 = vpack.c.b16 %v1217, %v1213
    %v1610 = vpack.c.b16 %v1222, %v1218
    %v1611 = vpack.c.b16 %v1223, %v1219
    %v1612 = vpack.c.b16 %v1224, %v1220
    %v1613 = vpack.c.b16 %v1225, %v1221
    %v1614 = vpack.c.b16 %v1230, %v1226
    %v1615 = vpack.c.b16 %v1231, %v1227
    %v1616 = vpack.c.b16 %v1232, %v1228
    %v1617 = vpack.c.b16 %v1233, %v1229
    %v1618 = vpack.c.b16 %v1238, %v1234
    %v1619 = vpack.c.b16 %v1239, %v1235
    %v1620 = vpack.c.b16 %v1240, %v1236
    %v1621 = vpack.c.b16 %v1241, %v1237
    %v1622 = vpack.c.b16 %v1246, %v1242
    %v1623 = vpack.c.b16 %v1247, %v1243
    %v1624 = vpack.c.b16 %v1248, %v1244
    %v1625 = vpack.c.b16 %v1249, %v1245
    %v1626 = vpack.c.b16 %v1254, %v1250
    %v1627 = vpack.c.b16 %v1255, %v1251
    %v1628 = vpack.c.b16 %v1256, %v1252
    %v1629 = vpack.c.b16 %v1257, %v1253
    %v1630 = vpack.c.b16 %v1262, %v1258
    %v1631 = vpack.c.b16 %v1263, %v1259
    %v1632 = vpack.c.b16 %v1264, %v1260
    %v1633 = vpack.c.b16 %v1265, %v1261
    %v1634 = vpack.c.b16 %v1270, %v1266
    %v1635 = vpack.c.b16 %v1271, %v1267
    %v1636 = vpack.c.b16 %v1272, %v1268
    %v1637 = vpack.c.b16 %v1273, %v1269
    %v1638 = vpack.c.b16 %v1278, %v1274
    %v1639 = vpack.c.b16 %v1279, %v1275
    %v1640 = vpack.c.b16 %v1280, %v1276
    %v1641 = vpack.c.b16 %v1281, %v1277
    %v1642 = vpack.c.b16 %v1286, %v1282
    %v1643 = vpack.c.b16 %v1287, %v1283
    %v1644 = vpack.c.b16 %v1288, %v1284
    %v1645 = vpack.c.b16 %v1289, %v1285
    %v1646 = vpack.c.b16 %v1294, %v1290
    %v1647 = vpack.c.b16 %v1295, %v1291
    %v1648 = vpack.c.b16 %v1296, %v1292
    %v1649 = vpack.c.b16 %v1297, %v1293
    %v1650 = vpack.c.b16 %v1302, %v1298
    %v1651 = vpack.c.b16 %v1303, %v1299
    %v1652 = vpack.c.b16 %v1304, %v1300
    %v1653 = vpack.c.b16 %v1305, %v1301
    %v1654 = vpack.c.b16 %v1310, %v1306
    %v1655 = vpack.c.b16 %v1311, %v1307
    %v1656 = vpack.c.b16 %v1312, %v1308
    %v1657 = vpack.c.b16 %v1313, %v1309
    %v1658 = vpack.c.b16 %v1318, %v1314
    %v1659 = vpack.c.b16 %v1319, %v1315
    %v1660 = vpack.c.b16 %v1320, %v1316
    %v1661 = vpack.c.b16 %v1321, %v1317
    %v1662 = vpack.c.b16 %v1326, %v1322
    %v1663 = vpack.c.b16 %v1327, %v1323
    %v1664 = vpack.c.b16 %v1328, %v1324
    %v1665 = vpack.c.b16 %v1329, %v1325
    %v1666 = vpack.c.b16 %v1334, %v1330
    %v1667 = vpack.c.b16 %v1335, %v1331
    %v1668 = vpack.c.b16 %v1336, %v1332
    %v1669 = vpack.c.b16 %v1337, %v1333
    %v1670 = vpack.c.b16 %v1342, %v1338
    %v1671 = vpack.c.b16 %v1343, %v1339
    %v1672 = vpack.c.b16 %v1344, %v1340
    %v1673 = vpack.c.b16 %v1345, %v1341
    %v1674 = vpack.c.b16 %v1350, %v1346
    %v1675 = vpack.c.b16 %v1351, %v1347
    %v1676 = vpack.c.b16 %v1352, %v1348
    %v1677 = vpack.c.b16 %v1353, %v1349
    %v1678 = vpack.c.b16 %v1358, %v1354
    %v1679 = vpack.c.b16 %v1359, %v1355
    %v1680 = vpack.c.b16 %v1360, %v1356
    %v1681 = vpack.c.b16 %v1361, %v1357
    %v1682 = vpack.c.b16 %v1366, %v1362
    %v1683 = vpack.c.b16 %v1367, %v1363
    %v1684 = vpack.c.b16 %v1368, %v1364
    %v1685 = vpack.c.b16 %v1369, %v1365
    %v1686 = vpack.c.b16 %v1374, %v1370
    %v1687 = vpack.c.b16 %v1375, %v1371
    %v1688 = vpack.c.b16 %v1376, %v1372
    %v1689 = vpack.c.b16 %v1377, %v1373
    %v1690 = vpack.c.b16 %v1382, %v1378
    %v1691 = vpack.c.b16 %v1383, %v1379
    %v1692 = vpack.c.b16 %v1384, %v1380
    %v1693 = vpack.c.b16 %v1385, %v1381
    %v1694 = vpack.c.b16 %v1390, %v1386
    %v1695 = vpack.c.b16 %v1391, %v1387
    %v1696 = vpack.c.b16 %v1392, %v1388
    %v1697 = vpack.c.b16 %v1393, %v1389
    %v1698 = vpack.c.b16 %v1398, %v1394
    %v1699 = vpack.c.b16 %v1399, %v1395
    %v1700 = vpack.c.b16 %v1400, %v1396
    %v1701 = vpack.c.b16 %v1401, %v1397
    %v1702 = vpack.c.b16 %v1406, %v1402
    %v1703 = vpack.c.b16 %v1407, %v1403
    %v1704 = vpack.c.b16 %v1408, %v1404
    %v1705 = vpack.c.b16 %v1409, %v1405
    %v1706 = vpack.c.b16 %v1414, %v1410
    %v1707 = vpack.c.b16 %v1415, %v1411
    %v1708 = vpack.c.b16 %v1416, %v1412
    %v1709 = vpack.c.b16 %v1417, %v1413
    %v1710 = vpack.c.b16 %v1422, %v1418
    %v1711 = vpack.c.b16 %v1423, %v1419
    %v1712 = vpack.c.b16 %v1424, %v1420
    %v1713 = vpack.c.b16 %v1425, %v1421
    %v1714 = vpack.c.b16 %v1430, %v1426
    %v1715 = vpack.c.b16 %v1431, %v1427
    %v1716 = vpack.c.b16 %v1432, %v1428
    %v1717 = vpack.c.b16 %v1433, %v1429
    %v1718 = vpack.c.b16 %v1438, %v1434
    %v1719 = vpack.c.b16 %v1439, %v1435
    %v1720 = vpack.c.b16 %v1440, %v1436
    %v1721 = vpack.c.b16 %v1441, %v1437
    %v1722 = vpack.c.b16 %v1446, %v1442
    %v1723 = vpack.c.b16 %v1447, %v1443
    %v1724 = vpack.c.b16 %v1448, %v1444
    %v1725 = vpack.c.b16 %v1449, %v1445
    %v1726 = vpack.c.b16 %v1454, %v1450
    %v1727 = vpack.c.b16 %v1455, %v1451
    %v1728 = vpack.c.b16 %v1456, %v1452
    %v1729 = vpack.c.b16 %v1457, %v1453
    %v1730 = vpack.c.b16 %v1462, %v1458
    %v1731 = vpack.c.b16 %v1463, %v1459
    %v1732 = vpack.c.b16 %v1464, %v1460
    %v1733 = vpack.c.b16 %v1465, %v1461
    %v1734 = vpack.c.b16 %v1470, %v1466
    %v1735 = vpack.c.b16 %v1471, %v1467
    %v1736 = vpack.c.b16 %v1472, %v1468
    %v1737 = vpack.c.b16 %v1473, %v1469
    %v1738 = vpack.c.b16 %v1478, %v1474
    %v1739 = vpack.c.b16 %v1479, %v1475
    %v1740 = vpack.c.b16 %v1480, %v1476
    %v1741 = vpack.c.b16 %v1481, %v1477
    %v1742 = vpack.c.b16 %v1486, %v1482
    %v1743 = vpack.c.b16 %v1487, %v1483
    %v1744 = vpack.c.b16 %v1488, %v1484
    %v1745 = vpack.c.b16 %v1489, %v1485
    %2002 = vmatprep.subr.bf16.mxu0 %v1519
    %2003 = vmatpush1.bf16.msra.mxu0 %v1518
    %2004 = vmatprep.subr.bf16.mxu0 %v1515
    %2005 = vmatpush1.bf16.msra.mxu0 %v1514
    %2006 = vmatprep.subr.bf16.mxu0 %v1511
    %2007 = vmatpush1.bf16.msra.mxu0 %v1510
    %2008 = vmatprep.subr.bf16.mxu0 %v1507
    %2009 = vmatpush1.bf16.msra.mxu0 %v1506
    %2010 = vmatprep.subr.bf16.mxu0 %v1503
    %2011 = vmatpush1.bf16.msra.mxu0 %v1502
    %2012 = vmatprep.subr.bf16.mxu0 %v1499
    %2013 = vmatpush1.bf16.msra.mxu0 %v1498
    %2014 = vmatprep.subr.bf16.mxu0 %v1495
    %2015 = vmatpush1.bf16.msra.mxu0 %v1494
    %2016 = vmatprep.subr.bf16.mxu0 %v1491
    %2017 = vmatpush1.bf16.msra.mxu0 %v1490
    %2018 = vmatprep.subr.bf16.mxu0 %v1551
    %2019 = vmatpush2.bf16.msra.mxu0 %v1550
    %2020 = vmatprep.subr.bf16.mxu0 %v1547
    %2021 = vmatpush2.bf16.msra.mxu0 %v1546
    %2022 = vmatprep.subr.bf16.mxu0 %v1543
    %2023 = vmatpush2.bf16.msra.mxu0 %v1542
    %2024 = vmatprep.subr.bf16.mxu0 %v1539
    %2025 = vmatpush2.bf16.msra.mxu0 %v1538
    %2026 = vmatprep.subr.bf16.mxu0 %v1535
    %2027 = vmatpush2.bf16.msra.mxu0 %v1534
    %2028 = vmatprep.subr.bf16.mxu0 %v1531
    %2029 = vmatpush2.bf16.msra.mxu0 %v1530
    %2030 = vmatprep.subr.bf16.mxu0 %v1527
    %2031 = vmatpush2.bf16.msra.mxu0 %v1526
    %2032 = vmatprep.subr.bf16.mxu0 %v1523
    %2033 = vmatpush2.bf16.msra.mxu0 %v1522
    %2034 = vmatprep.mubr.bf16.mxu0 %v459
    %2035 = vmatmul.mubr.bf16.gmra.mxu0 %v458
    %v2036 = vpop.f32.mrf.mxu0
    %v2037 = vadd.f32 0.0, %v2036
    %v2038 = vpop.f32.mrf.mxu0
    %v2039 = vadd.f32 0.0, %v2038
    %v2040 = vpop.f32.mrf.mxu0
    %v2041 = vpop.f32.mrf.mxu0
    %2042 = vdwg.mxu0
    %2043 = vmatprep.subr.bf16.mxu0 %v1583
    %2044 = vmatpush1.bf16.msra.mxu0 %v1582
    %2045 = vmatprep.subr.bf16.mxu0 %v1579
    %2046 = vmatpush1.bf16.msra.mxu0 %v1578
    %2047 = vmatprep.subr.bf16.mxu0 %v1575
    %2048 = vmatpush1.bf16.msra.mxu0 %v1574
    %2049 = vmatprep.subr.bf16.mxu0 %v1571
    %2050 = vmatpush1.bf16.msra.mxu0 %v1570
    %2051 = vmatprep.subr.bf16.mxu0 %v1567
    %2052 = vmatpush1.bf16.msra.mxu0 %v1566
    %2053 = vmatprep.subr.bf16.mxu0 %v1563
    %2054 = vmatpush1.bf16.msra.mxu0 %v1562
    %2055 = vmatprep.subr.bf16.mxu0 %v1559
    %2056 = vmatpush1.bf16.msra.mxu0 %v1558
    %2057 = vmatprep.subr.bf16.mxu0 %v1555
    %2058 = vmatpush1.bf16.msra.mxu0 %v1554
    %2059 = vmatprep.subr.bf16.mxu0 %v1615
    %2060 = vmatpush2.bf16.msra.mxu0 %v1614
    %2061 = vmatprep.subr.bf16.mxu0 %v1611
    %2062 = vmatpush2.bf16.msra.mxu0 %v1610
    %2063 = vmatprep.subr.bf16.mxu0 %v1607
    %2064 = vmatpush2.bf16.msra.mxu0 %v1606
    %2065 = vmatprep.subr.bf16.mxu0 %v1603
    %2066 = vmatpush2.bf16.msra.mxu0 %v1602
    %2067 = vmatprep.subr.bf16.mxu0 %v1599
    %2068 = vmatpush2.bf16.msra.mxu0 %v1598
    %2069 = vmatprep.subr.bf16.mxu0 %v1595
    %2070 = vmatpush2.bf16.msra.mxu0 %v1594
    %2071 = vmatprep.subr.bf16.mxu0 %v1591
    %2072 = vmatpush2.bf16.msra.mxu0 %v1590
    %2073 = vmatprep.subr.bf16.mxu0 %v1587
    %2074 = vmatpush2.bf16.msra.mxu0 %v1586
    %2075 = vmatprep.mubr.bf16.mxu0 %v461
    %2076 = vmatmul.mubr.bf16.gmra.mxu0 %v460
    %v2077 = vpop.f32.mrf.mxu0
    %v2078 = vadd.f32 %v2037, %v2077
    %v2079 = vpop.f32.mrf.mxu0
    %v2080 = vadd.f32 %v2039, %v2079
    %v2081 = vpop.f32.mrf.mxu0
    %v2082 = vpop.f32.mrf.mxu0
    %2083 = vdwg.mxu0
    %2084 = vmatprep.subr.bf16.mxu0 %v1647
    %2085 = vmatpush1.bf16.msra.mxu0 %v1646
    %2086 = vmatprep.subr.bf16.mxu0 %v1643
    %2087 = vmatpush1.bf16.msra.mxu0 %v1642
    %2088 = vmatprep.subr.bf16.mxu0 %v1639
    %2089 = vmatpush1.bf16.msra.mxu0 %v1638
    %2090 = vmatprep.subr.bf16.mxu0 %v1635
    %2091 = vmatpush1.bf16.msra.mxu0 %v1634
    %2092 = vmatprep.subr.bf16.mxu0 %v1631
    %2093 = vmatpush1.bf16.msra.mxu0 %v1630
    %2094 = vmatprep.subr.bf16.mxu0 %v1627
    %2095 = vmatpush1.bf16.msra.mxu0 %v1626
    %2096 = vmatprep.subr.bf16.mxu0 %v1623
    %2097 = vmatpush1.bf16.msra.mxu0 %v1622
    %2098 = vmatprep.subr.bf16.mxu0 %v1619
    %2099 = vmatpush1.bf16.msra.mxu0 %v1618
    %2100 = vmatprep.subr.bf16.mxu0 %v1679
    %2101 = vmatpush2.bf16.msra.mxu0 %v1678
    %2102 = vmatprep.subr.bf16.mxu0 %v1675
    %2103 = vmatpush2.bf16.msra.mxu0 %v1674
    %2104 = vmatprep.subr.bf16.mxu0 %v1671
    %2105 = vmatpush2.bf16.msra.mxu0 %v1670
    %2106 = vmatprep.subr.bf16.mxu0 %v1667
    %2107 = vmatpush2.bf16.msra.mxu0 %v1666
    %2108 = vmatprep.subr.bf16.mxu0 %v1663
    %2109 = vmatpush2.bf16.msra.mxu0 %v1662
    %2110 = vmatprep.subr.bf16.mxu0 %v1659
    %2111 = vmatpush2.bf16.msra.mxu0 %v1658
    %2112 = vmatprep.subr.bf16.mxu0 %v1655
    %2113 = vmatpush2.bf16.msra.mxu0 %v1654
    %2114 = vmatprep.subr.bf16.mxu0 %v1651
    %2115 = vmatpush2.bf16.msra.mxu0 %v1650
    %2116 = vmatprep.mubr.bf16.mxu0 %v463
    %2117 = vmatmul.mubr.bf16.gmra.mxu0 %v462
    %v2118 = vpop.f32.mrf.mxu0
    %v2119 = vadd.f32 %v2078, %v2118
    %v2120 = vpop.f32.mrf.mxu0
    %v2121 = vadd.f32 %v2080, %v2120
    %v2122 = vpop.f32.mrf.mxu0
    %v2123 = vpop.f32.mrf.mxu0
    %2124 = vdwg.mxu0
    %2125 = vmatprep.subr.bf16.mxu0 %v1711
    %2126 = vmatpush1.bf16.msra.mxu0 %v1710
    %2127 = vmatprep.subr.bf16.mxu0 %v1707
    %2128 = vmatpush1.bf16.msra.mxu0 %v1706
    %2129 = vmatprep.subr.bf16.mxu0 %v1703
    %2130 = vmatpush1.bf16.msra.mxu0 %v1702
    %2131 = vmatprep.subr.bf16.mxu0 %v1699
    %2132 = vmatpush1.bf16.msra.mxu0 %v1698
    %2133 = vmatprep.subr.bf16.mxu0 %v1695
    %2134 = vmatpush1.bf16.msra.mxu0 %v1694
    %2135 = vmatprep.subr.bf16.mxu0 %v1691
    %2136 = vmatpush1.bf16.msra.mxu0 %v1690
    %2137 = vmatprep.subr.bf16.mxu0 %v1687
    %2138 = vmatpush1.bf16.msra.mxu0 %v1686
    %2139 = vmatprep.subr.bf16.mxu0 %v1683
    %2140 = vmatpush1.bf16.msra.mxu0 %v1682
    %2141 = vmatprep.subr.bf16.mxu0 %v1743
    %2142 = vmatpush2.bf16.msra.mxu0 %v1742
    %2143 = vmatprep.subr.bf16.mxu0 %v1739
    %2144 = vmatpush2.bf16.msra.mxu0 %v1738
    %2145 = vmatprep.subr.bf16.mxu0 %v1735
    %2146 = vmatpush2.bf16.msra.mxu0 %v1734
    %2147 = vmatprep.subr.bf16.mxu0 %v1731
    %2148 = vmatpush2.bf16.msra.mxu0 %v1730
    %2149 = vmatprep.subr.bf16.mxu0 %v1727
    %2150 = vmatpush2.bf16.msra.mxu0 %v1726
    %2151 = vmatprep.subr.bf16.mxu0 %v1723
    %2152 = vmatpush2.bf16.msra.mxu0 %v1722
    %2153 = vmatprep.subr.bf16.mxu0 %v1719
    %2154 = vmatpush2.bf16.msra.mxu0 %v1718
    %2155 = vmatprep.subr.bf16.mxu0 %v1715
    %2156 = vmatpush2.bf16.msra.mxu0 %v1714
    %2157 = vmatprep.mubr.bf16.mxu0 %v465
    %2158 = vmatmul.mubr.bf16.gmra.mxu0 %v464
    %v2159 = vpop.f32.mrf.mxu0
    %v2160 = vadd.f32 %v2119, %v2159
    %v2161 = vpop.f32.mrf.mxu0
    %v2162 = vadd.f32 %v2121, %v2161
    %v2163 = vpop.f32.mrf.mxu0
    %v2164 = vpop.f32.mrf.mxu0
    %2165 = vdwg.mxu0
    %2166 = vmatprep.subr.bf16.mxu0 %v1521
    %2167 = vmatpush1.bf16.msra.mxu0 %v1520
    %2168 = vmatprep.subr.bf16.mxu0 %v1517
    %2169 = vmatpush1.bf16.msra.mxu0 %v1516
    %2170 = vmatprep.subr.bf16.mxu0 %v1513
    %2171 = vmatpush1.bf16.msra.mxu0 %v1512
    %2172 = vmatprep.subr.bf16.mxu0 %v1509
    %2173 = vmatpush1.bf16.msra.mxu0 %v1508
    %2174 = vmatprep.subr.bf16.mxu0 %v1505
    %2175 = vmatpush1.bf16.msra.mxu0 %v1504
    %2176 = vmatprep.subr.bf16.mxu0 %v1501
    %2177 = vmatpush1.bf16.msra.mxu0 %v1500
    %2178 = vmatprep.subr.bf16.mxu0 %v1497
    %2179 = vmatpush1.bf16.msra.mxu0 %v1496
    %2180 = vmatprep.subr.bf16.mxu0 %v1493
    %2181 = vmatpush1.bf16.msra.mxu0 %v1492
    %2182 = vmatprep.subr.bf16.mxu0 %v1553
    %2183 = vmatpush2.bf16.msra.mxu0 %v1552
    %2184 = vmatprep.subr.bf16.mxu0 %v1549
    %2185 = vmatpush2.bf16.msra.mxu0 %v1548
    %2186 = vmatprep.subr.bf16.mxu0 %v1545
    %2187 = vmatpush2.bf16.msra.mxu0 %v1544
    %2188 = vmatprep.subr.bf16.mxu0 %v1541
    %2189 = vmatpush2.bf16.msra.mxu0 %v1540
    %2190 = vmatprep.subr.bf16.mxu0 %v1537
    %2191 = vmatpush2.bf16.msra.mxu0 %v1536
    %2192 = vmatprep.subr.bf16.mxu0 %v1533
    %2193 = vmatpush2.bf16.msra.mxu0 %v1532
    %2194 = vmatprep.subr.bf16.mxu0 %v1529
    %2195 = vmatpush2.bf16.msra.mxu0 %v1528
    %2196 = vmatprep.subr.bf16.mxu0 %v1525
    %2197 = vmatpush2.bf16.msra.mxu0 %v1524
    %2198 = vmatprep.mubr.bf16.mxu0 %v459
    %2199 = vmatmul.mubr.bf16.gmra.mxu0 %v458
    %v2200 = vpop.f32.mrf.mxu0
    %v2201 = vadd.f32 0.0, %v2200
    %v2202 = vpop.f32.mrf.mxu0
    %v2203 = vadd.f32 0.0, %v2202
    %v2204 = vpop.f32.mrf.mxu0
    %v2205 = vpop.f32.mrf.mxu0
    %2206 = vdwg.mxu0
    %2207 = vmatprep.subr.bf16.mxu0 %v1585
    %2208 = vmatpush1.bf16.msra.mxu0 %v1584
    %2209 = vmatprep.subr.bf16.mxu0 %v1581
    %2210 = vmatpush1.bf16.msra.mxu0 %v1580
    %2211 = vmatprep.subr.bf16.mxu0 %v1577
    %2212 = vmatpush1.bf16.msra.mxu0 %v1576
    %2213 = vmatprep.subr.bf16.mxu0 %v1573
    %2214 = vmatpush1.bf16.msra.mxu0 %v1572
    %2215 = vmatprep.subr.bf16.mxu0 %v1569
    %2216 = vmatpush1.bf16.msra.mxu0 %v1568
    %2217 = vmatprep.subr.bf16.mxu0 %v1565
    %2218 = vmatpush1.bf16.msra.mxu0 %v1564
    %2219 = vmatprep.subr.bf16.mxu0 %v1561
    %2220 = vmatpush1.bf16.msra.mxu0 %v1560
    %2221 = vmatprep.subr.bf16.mxu0 %v1557
    %2222 = vmatpush1.bf16.msra.mxu0 %v1556
    %2223 = vmatprep.subr.bf16.mxu0 %v1617
    %2224 = vmatpush2.bf16.msra.mxu0 %v1616
    %2225 = vmatprep.subr.bf16.mxu0 %v1613
    %2226 = vmatpush2.bf16.msra.mxu0 %v1612
    %2227 = vmatprep.subr.bf16.mxu0 %v1609
    %2228 = vmatpush2.bf16.msra.mxu0 %v1608
    %2229 = vmatprep.subr.bf16.mxu0 %v1605
    %2230 = vmatpush2.bf16.msra.mxu0 %v1604
    %2231 = vmatprep.subr.bf16.mxu0 %v1601
    %2232 = vmatpush2.bf16.msra.mxu0 %v1600
    %2233 = vmatprep.subr.bf16.mxu0 %v1597
    %2234 = vmatpush2.bf16.msra.mxu0 %v1596
    %2235 = vmatprep.subr.bf16.mxu0 %v1593
    %2236 = vmatpush2.bf16.msra.mxu0 %v1592
    %2237 = vmatprep.subr.bf16.mxu0 %v1589
    %2238 = vmatpush2.bf16.msra.mxu0 %v1588
    %2239 = vmatprep.mubr.bf16.mxu0 %v461
    %2240 = vmatmul.mubr.bf16.gmra.mxu0 %v460
    %v2241 = vpop.f32.mrf.mxu0
    %v2242 = vadd.f32 %v2201, %v2241
    %v2243 = vpop.f32.mrf.mxu0
    %v2244 = vadd.f32 %v2203, %v2243
    %v2245 = vpop.f32.mrf.mxu0
    %v2246 = vpop.f32.mrf.mxu0
    %2247 = vdwg.mxu0
    %2248 = vmatprep.subr.bf16.mxu0 %v1649
    %2249 = vmatpush1.bf16.msra.mxu0 %v1648
    %2250 = vmatprep.subr.bf16.mxu0 %v1645
    %2251 = vmatpush1.bf16.msra.mxu0 %v1644
    %2252 = vmatprep.subr.bf16.mxu0 %v1641
    %2253 = vmatpush1.bf16.msra.mxu0 %v1640
    %2254 = vmatprep.subr.bf16.mxu0 %v1637
    %2255 = vmatpush1.bf16.msra.mxu0 %v1636
    %2256 = vmatprep.subr.bf16.mxu0 %v1633
    %2257 = vmatpush1.bf16.msra.mxu0 %v1632
    %2258 = vmatprep.subr.bf16.mxu0 %v1629
    %2259 = vmatpush1.bf16.msra.mxu0 %v1628
    %2260 = vmatprep.subr.bf16.mxu0 %v1625
    %2261 = vmatpush1.bf16.msra.mxu0 %v1624
    %2262 = vmatprep.subr.bf16.mxu0 %v1621
    %2263 = vmatpush1.bf16.msra.mxu0 %v1620
    %2264 = vmatprep.subr.bf16.mxu0 %v1681
    %2265 = vmatpush2.bf16.msra.mxu0 %v1680
    %2266 = vmatprep.subr.bf16.mxu0 %v1677
    %2267 = vmatpush2.bf16.msra.mxu0 %v1676
    %2268 = vmatprep.subr.bf16.mxu0 %v1673
    %2269 = vmatpush2.bf16.msra.mxu0 %v1672
    %2270 = vmatprep.subr.bf16.mxu0 %v1669
    %2271 = vmatpush2.bf16.msra.mxu0 %v1668
    %2272 = vmatprep.subr.bf16.mxu0 %v1665
    %2273 = vmatpush2.bf16.msra.mxu0 %v1664
    %2274 = vmatprep.subr.bf16.mxu0 %v1661
    %2275 = vmatpush2.bf16.msra.mxu0 %v1660
    %2276 = vmatprep.subr.bf16.mxu0 %v1657
    %2277 = vmatpush2.bf16.msra.mxu0 %v1656
    %2278 = vmatprep.subr.bf16.mxu0 %v1653
    %2279 = vmatpush2.bf16.msra.mxu0 %v1652
    %2280 = vmatprep.mubr.bf16.mxu0 %v463
    %2281 = vmatmul.mubr.bf16.gmra.mxu0 %v462
    %v2282 = vpop.f32.mrf.mxu0
    %v2283 = vadd.f32 %v2242, %v2282
    %v2284 = vpop.f32.mrf.mxu0
    %v2285 = vadd.f32 %v2244, %v2284
    %v2286 = vpop.f32.mrf.mxu0
    %v2287 = vpop.f32.mrf.mxu0
    %2288 = vdwg.mxu0
    %2289 = vmatprep.subr.bf16.mxu0 %v1713
    %2290 = vmatpush1.bf16.msra.mxu0 %v1712
    %2291 = vmatprep.subr.bf16.mxu0 %v1709
    %2292 = vmatpush1.bf16.msra.mxu0 %v1708
    %2293 = vmatprep.subr.bf16.mxu0 %v1705
    %2294 = vmatpush1.bf16.msra.mxu0 %v1704
    %2295 = vmatprep.subr.bf16.mxu0 %v1701
    %2296 = vmatpush1.bf16.msra.mxu0 %v1700
    %2297 = vmatprep.subr.bf16.mxu0 %v1697
    %2298 = vmatpush1.bf16.msra.mxu0 %v1696
    %2299 = vmatprep.subr.bf16.mxu0 %v1693
    %2300 = vmatpush1.bf16.msra.mxu0 %v1692
    %2301 = vmatprep.subr.bf16.mxu0 %v1689
    %2302 = vmatpush1.bf16.msra.mxu0 %v1688
    %2303 = vmatprep.subr.bf16.mxu0 %v1685
    %2304 = vmatpush1.bf16.msra.mxu0 %v1684
    %2305 = vmatprep.subr.bf16.mxu0 %v1745
    %2306 = vmatpush2.bf16.msra.mxu0 %v1744
    %2307 = vmatprep.subr.bf16.mxu0 %v1741
    %2308 = vmatpush2.bf16.msra.mxu0 %v1740
    %2309 = vmatprep.subr.bf16.mxu0 %v1737
    %2310 = vmatpush2.bf16.msra.mxu0 %v1736
    %2311 = vmatprep.subr.bf16.mxu0 %v1733
    %2312 = vmatpush2.bf16.msra.mxu0 %v1732
    %2313 = vmatprep.subr.bf16.mxu0 %v1729
    %2314 = vmatpush2.bf16.msra.mxu0 %v1728
    %2315 = vmatprep.subr.bf16.mxu0 %v1725
    %2316 = vmatpush2.bf16.msra.mxu0 %v1724
    %2317 = vmatprep.subr.bf16.mxu0 %v1721
    %2318 = vmatpush2.bf16.msra.mxu0 %v1720
    %2319 = vmatprep.subr.bf16.mxu0 %v1717
    %2320 = vmatpush2.bf16.msra.mxu0 %v1716
    %2321 = vmatprep.mubr.bf16.mxu0 %v465
    %2322 = vmatmul.mubr.bf16.gmra.mxu0 %v464
    %v2323 = vpop.f32.mrf.mxu0
    %v2324 = vadd.f32 %v2283, %v2323
    %v2325 = vpop.f32.mrf.mxu0
    %v2326 = vadd.f32 %v2285, %v2325
    %v2327 = vpop.f32.mrf.mxu0
    %v2328 = vpop.f32.mrf.mxu0
    %2329 = vdwg.mxu0
    %v2330 = vpack.c.bf16 %v2160, %v2160
    %v2331 = vpack.c.bf16 %v2162, %v2162
    %v2332 = vpack.c.bf16 %v2324, %v2324
    %v2333 = vpack.c.bf16 %v2326, %v2326
    %v2334 = vld [vmem:[%s4] sm:$0xf]
    %v2337 = vunpack.c.l.s4 1966171168
    %v2338 = vunpack.c.0.s8 %v2337
    %v2339 = vlaneseq
    %v2340 = vshrl.u32 %v2339, 7
    %v2341 = vsub.s32 %v2338, %v2340
    %v2342 = vrot.slane %v2334, %v2341
    %v2343 = vcombine.high %v2342, %v2342
    %v2345 = vunpack.c.l.s4 1966171168
    %v2346 = vunpack.c.0.s8 %v2345
    %v2347 = vlaneseq
    %v2348 = vshrl.u32 %v2347, 7
    %v2349 = vsub.s32 %v2346, %v2348
    %v2350 = vrot.slane %v2342, %v2349
    %v2352 = vunpack.c.l.s4 1966171168
    %v2353 = vunpack.c.0.s8 %v2352
    %v2354 = vlaneseq
    %v2355 = vshrl.u32 %v2354, 7
    %v2356 = vsub.s32 %v2353, %v2355
    %v2357 = vrot.slane %v2343, %v2356
    %v2358 = vcombine.high %v2350, %v2350
    %v2359 = vcombine.high %v2357, %v2357
    %v2361 = vpack.i.b16 %v2350, %v2350
    %v2363 = vlaneseq
    %v2364 = vshrl.u32 %v2363, 7
    %v2365 = vsub.s32 0, %v2364
    %v2366 = vrot.slane %v2361, %v2365
    %v2368 = vpack.i.b16 %v2357, %v2357
    %v2370 = vlaneseq
    %v2371 = vshrl.u32 %v2370, 7
    %v2372 = vsub.s32 0, %v2371
    %v2373 = vrot.slane %v2368, %v2372
    %v2375 = vpack.i.b16 %v2358, %v2358
    %v2377 = vlaneseq
    %v2378 = vshrl.u32 %v2377, 7
    %v2379 = vsub.s32 0, %v2378
    %v2380 = vrot.slane %v2375, %v2379
    %v2382 = vpack.i.b16 %v2359, %v2359
    %v2384 = vlaneseq
    %v2385 = vshrl.u32 %v2384, 7
    %v2386 = vsub.s32 0, %v2385
    %v2387 = vrot.slane %v2382, %v2386
    %v2388 = vadd.bf16 %v2330, %v2366
    %v2389 = vadd.bf16 %v2331, %v2373
    %v2390 = vadd.bf16 %v2332, %v2380
    %v2391 = vadd.bf16 %v2333, %v2387
    %v2392 = vmax.bf16 %v2388, 0
    %v2393 = vmax.bf16 %v2389, 0
    %v2394 = vmax.bf16 %v2390, 0
    %v2395 = vmax.bf16 %v2391, 0
    %v2396 = vld [vmem:[#allocation5] sm:$0xff]
    %v2397 = vld [vmem:[#allocation5 + $0x8] sm:$0xff]
    %v2398 = vld [vmem:[#allocation5 + $0x10] sm:$0xff]
    %v2399 = vld [vmem:[#allocation5 + $0x18] sm:$0xff]
    %v2400 = vld [vmem:[#allocation5 + $0x20] sm:$0xff]
    %v2401 = vld [vmem:[#allocation5 + $0x28] sm:$0xff]
    %v2402 = vld [vmem:[#allocation5 + $0x30] sm:$0xff]
    %v2403 = vld [vmem:[#allocation5 + $0x38] sm:$0xff]
    %v2404 = vld [vmem:[#allocation5 + $0x40] sm:$0xff]
    %v2405 = vld [vmem:[#allocation5 + $0x48] sm:$0xff]
    %v2406 = vld [vmem:[#allocation5 + $0x50] sm:$0xff]
    %v2407 = vld [vmem:[#allocation5 + $0x58] sm:$0xff]
    %v2408 = vld [vmem:[#allocation5 + $0x60] sm:$0xff]
    %v2409 = vld [vmem:[#allocation5 + $0x68] sm:$0xff]
    %v2410 = vld [vmem:[#allocation5 + $0x70] sm:$0xff]
    %v2411 = vld [vmem:[#allocation5 + $0x78] sm:$0xff]
    %v2412 = vld [vmem:[#allocation5 + $0x80] sm:$0xff]
    %v2413 = vld [vmem:[#allocation5 + $0x88] sm:$0xff]
    %v2414 = vld [vmem:[#allocation5 + $0x90] sm:$0xff]
    %v2415 = vld [vmem:[#allocation5 + $0x98] sm:$0xff]
    %v2416 = vld [vmem:[#allocation5 + $0xa0] sm:$0xff]
    %v2417 = vld [vmem:[#allocation5 + $0xa8] sm:$0xff]
    %v2418 = vld [vmem:[#allocation5 + $0xb0] sm:$0xff]
    %v2419 = vld [vmem:[#allocation5 + $0xb8] sm:$0xff]
    %v2420 = vld [vmem:[#allocation5 + $0xc0] sm:$0xff]
    %v2421 = vld [vmem:[#allocation5 + $0xc8] sm:$0xff]
    %v2422 = vld [vmem:[#allocation5 + $0xd0] sm:$0xff]
    %v2423 = vld [vmem:[#allocation5 + $0xd8] sm:$0xff]
    %v2424 = vld [vmem:[#allocation5 + $0xe0] sm:$0xff]
    %v2425 = vld [vmem:[#allocation5 + $0xe8] sm:$0xff]
    %v2426 = vld [vmem:[#allocation5 + $0xf0] sm:$0xff]
    %v2427 = vld [vmem:[#allocation5 + $0xf8] sm:$0xff]
    %v2428 = vld [vmem:[#allocation5 + $0x100] sm:$0xff]
    %v2429 = vld [vmem:[#allocation5 + $0x108] sm:$0xff]
    %v2430 = vld [vmem:[#allocation5 + $0x110] sm:$0xff]
    %v2431 = vld [vmem:[#allocation5 + $0x118] sm:$0xff]
    %v2432 = vld [vmem:[#allocation5 + $0x120] sm:$0xff]
    %v2433 = vld [vmem:[#allocation5 + $0x128] sm:$0xff]
    %v2434 = vld [vmem:[#allocation5 + $0x130] sm:$0xff]
    %v2435 = vld [vmem:[#allocation5 + $0x138] sm:$0xff]
    %v2436 = vld [vmem:[#allocation5 + $0x140] sm:$0xff]
    %v2437 = vld [vmem:[#allocation5 + $0x148] sm:$0xff]
    %v2438 = vld [vmem:[#allocation5 + $0x150] sm:$0xff]
    %v2439 = vld [vmem:[#allocation5 + $0x158] sm:$0xff]
    %v2440 = vld [vmem:[#allocation5 + $0x160] sm:$0xff]
    %v2441 = vld [vmem:[#allocation5 + $0x168] sm:$0xff]
    %v2442 = vld [vmem:[#allocation5 + $0x170] sm:$0xff]
    %v2443 = vld [vmem:[#allocation5 + $0x178] sm:$0xff]
    %v2444 = vld [vmem:[#allocation5 + $0x180] sm:$0xff]
    %v2445 = vld [vmem:[#allocation5 + $0x188] sm:$0xff]
    %v2446 = vld [vmem:[#allocation5 + $0x190] sm:$0xff]
    %v2447 = vld [vmem:[#allocation5 + $0x198] sm:$0xff]
    %v2448 = vld [vmem:[#allocation5 + $0x1a0] sm:$0xff]
    %v2449 = vld [vmem:[#allocation5 + $0x1a8] sm:$0xff]
    %v2450 = vld [vmem:[#allocation5 + $0x1b0] sm:$0xff]
    %v2451 = vld [vmem:[#allocation5 + $0x1b8] sm:$0xff]
    %v2452 = vld [vmem:[#allocation5 + $0x1c0] sm:$0xff]
    %v2453 = vld [vmem:[#allocation5 + $0x1c8] sm:$0xff]
    %v2454 = vld [vmem:[#allocation5 + $0x1d0] sm:$0xff]
    %v2455 = vld [vmem:[#allocation5 + $0x1d8] sm:$0xff]
    %v2456 = vld [vmem:[#allocation5 + $0x1e0] sm:$0xff]
    %v2457 = vld [vmem:[#allocation5 + $0x1e8] sm:$0xff]
    %v2458 = vld [vmem:[#allocation5 + $0x1f0] sm:$0xff]
    %v2459 = vld [vmem:[#allocation5 + $0x1f8] sm:$0xff]
    %v2524 = vunpack.c.l.b16 %v2396
    %v2525 = vunpack.c.h.b16 %v2396
    %v2526 = vunpack.c.l.b16 %v2397
    %v2527 = vunpack.c.h.b16 %v2397
    %v2528 = vunpack.c.l.b16 %v2398
    %v2529 = vunpack.c.h.b16 %v2398
    %v2530 = vunpack.c.l.b16 %v2399
    %v2531 = vunpack.c.h.b16 %v2399
    %v2532 = vunpack.c.l.b16 %v2400
    %v2533 = vunpack.c.h.b16 %v2400
    %v2534 = vunpack.c.l.b16 %v2401
    %v2535 = vunpack.c.h.b16 %v2401
    %v2536 = vunpack.c.l.b16 %v2402
    %v2537 = vunpack.c.h.b16 %v2402
    %v2538 = vunpack.c.l.b16 %v2403
    %v2539 = vunpack.c.h.b16 %v2403
    %v2540 = vunpack.c.l.b16 %v2404
    %v2541 = vunpack.c.h.b16 %v2404
    %v2542 = vunpack.c.l.b16 %v2405
    %v2543 = vunpack.c.h.b16 %v2405
    %v2544 = vunpack.c.l.b16 %v2406
    %v2545 = vunpack.c.h.b16 %v2406
    %v2546 = vunpack.c.l.b16 %v2407
    %v2547 = vunpack.c.h.b16 %v2407
    %v2548 = vunpack.c.l.b16 %v2408
    %v2549 = vunpack.c.h.b16 %v2408
    %v2550 = vunpack.c.l.b16 %v2409
    %v2551 = vunpack.c.h.b16 %v2409
    %v2552 = vunpack.c.l.b16 %v2410
    %v2553 = vunpack.c.h.b16 %v2410
    %v2554 = vunpack.c.l.b16 %v2411
    %v2555 = vunpack.c.h.b16 %v2411
    %v2556 = vunpack.c.l.b16 %v2412
    %v2557 = vunpack.c.h.b16 %v2412
    %v2558 = vunpack.c.l.b16 %v2413
    %v2559 = vunpack.c.h.b16 %v2413
    %v2560 = vunpack.c.l.b16 %v2414
    %v2561 = vunpack.c.h.b16 %v2414
    %v2562 = vunpack.c.l.b16 %v2415
    %v2563 = vunpack.c.h.b16 %v2415
    %v2564 = vunpack.c.l.b16 %v2416
    %v2565 = vunpack.c.h.b16 %v2416
    %v2566 = vunpack.c.l.b16 %v2417
    %v2567 = vunpack.c.h.b16 %v2417
    %v2568 = vunpack.c.l.b16 %v2418
    %v2569 = vunpack.c.h.b16 %v2418
    %v2570 = vunpack.c.l.b16 %v2419
    %v2571 = vunpack.c.h.b16 %v2419
    %v2572 = vunpack.c.l.b16 %v2420
    %v2573 = vunpack.c.h.b16 %v2420
    %v2574 = vunpack.c.l.b16 %v2421
    %v2575 = vunpack.c.h.b16 %v2421
    %v2576 = vunpack.c.l.b16 %v2422
    %v2577 = vunpack.c.h.b16 %v2422
    %v2578 = vunpack.c.l.b16 %v2423
    %v2579 = vunpack.c.h.b16 %v2423
    %v2580 = vunpack.c.l.b16 %v2424
    %v2581 = vunpack.c.h.b16 %v2424
    %v2582 = vunpack.c.l.b16 %v2425
    %v2583 = vunpack.c.h.b16 %v2425
    %v2584 = vunpack.c.l.b16 %v2426
    %v2585 = vunpack.c.h.b16 %v2426
    %v2586 = vunpack.c.l.b16 %v2427
    %v2587 = vunpack.c.h.b16 %v2427
    %v2588 = vunpack.c.l.b16 %v2428
    %v2589 = vunpack.c.h.b16 %v2428
    %v2590 = vunpack.c.l.b16 %v2429
    %v2591 = vunpack.c.h.b16 %v2429
    %v2592 = vunpack.c.l.b16 %v2430
    %v2593 = vunpack.c.h.b16 %v2430
    %v2594 = vunpack.c.l.b16 %v2431
    %v2595 = vunpack.c.h.b16 %v2431
    %v2596 = vunpack.c.l.b16 %v2432
    %v2597 = vunpack.c.h.b16 %v2432
    %v2598 = vunpack.c.l.b16 %v2433
    %v2599 = vunpack.c.h.b16 %v2433
    %v2600 = vunpack.c.l.b16 %v2434
    %v2601 = vunpack.c.h.b16 %v2434
    %v2602 = vunpack.c.l.b16 %v2435
    %v2603 = vunpack.c.h.b16 %v2435
    %v2604 = vunpack.c.l.b16 %v2436
    %v2605 = vunpack.c.h.b16 %v2436
    %v2606 = vunpack.c.l.b16 %v2437
    %v2607 = vunpack.c.h.b16 %v2437
    %v2608 = vunpack.c.l.b16 %v2438
    %v2609 = vunpack.c.h.b16 %v2438
    %v2610 = vunpack.c.l.b16 %v2439
    %v2611 = vunpack.c.h.b16 %v2439
    %v2612 = vunpack.c.l.b16 %v2440
    %v2613 = vunpack.c.h.b16 %v2440
    %v2614 = vunpack.c.l.b16 %v2441
    %v2615 = vunpack.c.h.b16 %v2441
    %v2616 = vunpack.c.l.b16 %v2442
    %v2617 = vunpack.c.h.b16 %v2442
    %v2618 = vunpack.c.l.b16 %v2443
    %v2619 = vunpack.c.h.b16 %v2443
    %v2620 = vunpack.c.l.b16 %v2444
    %v2621 = vunpack.c.h.b16 %v2444
    %v2622 = vunpack.c.l.b16 %v2445
    %v2623 = vunpack.c.h.b16 %v2445
    %v2624 = vunpack.c.l.b16 %v2446
    %v2625 = vunpack.c.h.b16 %v2446
    %v2626 = vunpack.c.l.b16 %v2447
    %v2627 = vunpack.c.h.b16 %v2447
    %v2628 = vunpack.c.l.b16 %v2448
    %v2629 = vunpack.c.h.b16 %v2448
    %v2630 = vunpack.c.l.b16 %v2449
    %v2631 = vunpack.c.h.b16 %v2449
    %v2632 = vunpack.c.l.b16 %v2450
    %v2633 = vunpack.c.h.b16 %v2450
    %v2634 = vunpack.c.l.b16 %v2451
    %v2635 = vunpack.c.h.b16 %v2451
    %v2636 = vunpack.c.l.b16 %v2452
    %v2637 = vunpack.c.h.b16 %v2452
    %v2638 = vunpack.c.l.b16 %v2453
    %v2639 = vunpack.c.h.b16 %v2453
    %v2640 = vunpack.c.l.b16 %v2454
    %v2641 = vunpack.c.h.b16 %v2454
    %v2642 = vunpack.c.l.b16 %v2455
    %v2643 = vunpack.c.h.b16 %v2455
    %v2644 = vunpack.c.l.b16 %v2456
    %v2645 = vunpack.c.h.b16 %v2456
    %v2646 = vunpack.c.l.b16 %v2457
    %v2647 = vunpack.c.h.b16 %v2457
    %v2648 = vunpack.c.l.b16 %v2458
    %v2649 = vunpack.c.h.b16 %v2458
    %v2650 = vunpack.c.l.b16 %v2459
    %v2651 = vunpack.c.h.b16 %v2459
    %v2652 = vpack.c.b16 %v2526, %v2524
    %v2653 = vpack.c.b16 %v2527, %v2525
    %v2654 = vpack.c.b16 %v2530, %v2528
    %v2655 = vpack.c.b16 %v2531, %v2529
    %v2656 = vpack.c.b16 %v2534, %v2532
    %v2657 = vpack.c.b16 %v2535, %v2533
    %v2658 = vpack.c.b16 %v2538, %v2536
    %v2659 = vpack.c.b16 %v2539, %v2537
    %v2660 = vpack.c.b16 %v2542, %v2540
    %v2661 = vpack.c.b16 %v2543, %v2541
    %v2662 = vpack.c.b16 %v2546, %v2544
    %v2663 = vpack.c.b16 %v2547, %v2545
    %v2664 = vpack.c.b16 %v2550, %v2548
    %v2665 = vpack.c.b16 %v2551, %v2549
    %v2666 = vpack.c.b16 %v2554, %v2552
    %v2667 = vpack.c.b16 %v2555, %v2553
    %v2668 = vpack.c.b16 %v2558, %v2556
    %v2669 = vpack.c.b16 %v2559, %v2557
    %v2670 = vpack.c.b16 %v2562, %v2560
    %v2671 = vpack.c.b16 %v2563, %v2561
    %v2672 = vpack.c.b16 %v2566, %v2564
    %v2673 = vpack.c.b16 %v2567, %v2565
    %v2674 = vpack.c.b16 %v2570, %v2568
    %v2675 = vpack.c.b16 %v2571, %v2569
    %v2676 = vpack.c.b16 %v2574, %v2572
    %v2677 = vpack.c.b16 %v2575, %v2573
    %v2678 = vpack.c.b16 %v2578, %v2576
    %v2679 = vpack.c.b16 %v2579, %v2577
    %v2680 = vpack.c.b16 %v2582, %v2580
    %v2681 = vpack.c.b16 %v2583, %v2581
    %v2682 = vpack.c.b16 %v2586, %v2584
    %v2683 = vpack.c.b16 %v2587, %v2585
    %v2684 = vpack.c.b16 %v2590, %v2588
    %v2685 = vpack.c.b16 %v2591, %v2589
    %v2686 = vpack.c.b16 %v2594, %v2592
    %v2687 = vpack.c.b16 %v2595, %v2593
    %v2688 = vpack.c.b16 %v2598, %v2596
    %v2689 = vpack.c.b16 %v2599, %v2597
    %v2690 = vpack.c.b16 %v2602, %v2600
    %v2691 = vpack.c.b16 %v2603, %v2601
    %v2692 = vpack.c.b16 %v2606, %v2604
    %v2693 = vpack.c.b16 %v2607, %v2605
    %v2694 = vpack.c.b16 %v2610, %v2608
    %v2695 = vpack.c.b16 %v2611, %v2609
    %v2696 = vpack.c.b16 %v2614, %v2612
    %v2697 = vpack.c.b16 %v2615, %v2613
    %v2698 = vpack.c.b16 %v2618, %v2616
    %v2699 = vpack.c.b16 %v2619, %v2617
    %v2700 = vpack.c.b16 %v2622, %v2620
    %v2701 = vpack.c.b16 %v2623, %v2621
    %v2702 = vpack.c.b16 %v2626, %v2624
    %v2703 = vpack.c.b16 %v2627, %v2625
    %v2704 = vpack.c.b16 %v2630, %v2628
    %v2705 = vpack.c.b16 %v2631, %v2629
    %v2706 = vpack.c.b16 %v2634, %v2632
    %v2707 = vpack.c.b16 %v2635, %v2633
    %v2708 = vpack.c.b16 %v2638, %v2636
    %v2709 = vpack.c.b16 %v2639, %v2637
    %v2710 = vpack.c.b16 %v2642, %v2640
    %v2711 = vpack.c.b16 %v2643, %v2641
    %v2712 = vpack.c.b16 %v2646, %v2644
    %v2713 = vpack.c.b16 %v2647, %v2645
    %v2714 = vpack.c.b16 %v2650, %v2648
    %v2715 = vpack.c.b16 %v2651, %v2649
    %2780 = vmatprep.subr.bf16.mxu0 %v2667
    %2781 = vmatpush1.bf16.msra.mxu0 %v2666
    %2782 = vmatprep.subr.bf16.mxu0 %v2665
    %2783 = vmatpush1.bf16.msra.mxu0 %v2664
    %2784 = vmatprep.subr.bf16.mxu0 %v2663
    %2785 = vmatpush1.bf16.msra.mxu0 %v2662
    %2786 = vmatprep.subr.bf16.mxu0 %v2661
    %2787 = vmatpush1.bf16.msra.mxu0 %v2660
    %2788 = vmatprep.subr.bf16.mxu0 %v2659
    %2789 = vmatpush1.bf16.msra.mxu0 %v2658
    %2790 = vmatprep.subr.bf16.mxu0 %v2657
    %2791 = vmatpush1.bf16.msra.mxu0 %v2656
    %2792 = vmatprep.subr.bf16.mxu0 %v2655
    %2793 = vmatpush1.bf16.msra.mxu0 %v2654
    %2794 = vmatprep.subr.bf16.mxu0 %v2653
    %2795 = vmatpush1.bf16.msra.mxu0 %v2652
    %2796 = vmatprep.subr.bf16.mxu0 %v2683
    %2797 = vmatpush2.bf16.msra.mxu0 %v2682
    %2798 = vmatprep.subr.bf16.mxu0 %v2681
    %2799 = vmatpush2.bf16.msra.mxu0 %v2680
    %2800 = vmatprep.subr.bf16.mxu0 %v2679
    %2801 = vmatpush2.bf16.msra.mxu0 %v2678
    %2802 = vmatprep.subr.bf16.mxu0 %v2677
    %2803 = vmatpush2.bf16.msra.mxu0 %v2676
    %2804 = vmatprep.subr.bf16.mxu0 %v2675
    %2805 = vmatpush2.bf16.msra.mxu0 %v2674
    %2806 = vmatprep.subr.bf16.mxu0 %v2673
    %2807 = vmatpush2.bf16.msra.mxu0 %v2672
    %2808 = vmatprep.subr.bf16.mxu0 %v2671
    %2809 = vmatpush2.bf16.msra.mxu0 %v2670
    %2810 = vmatprep.subr.bf16.mxu0 %v2669
    %2811 = vmatpush2.bf16.msra.mxu0 %v2668
    %2812 = vmatprep.mubr.bf16.mxu0 %v2393
    %2813 = vmatmul.mubr.bf16.gmra.mxu0 %v2392
    %v2814 = vpop.f32.mrf.mxu0
    %v2815 = vadd.f32 0.0, %v2814
    %v2816 = vpop.f32.mrf.mxu0
    %v2817 = vadd.f32 0.0, %v2816
    %v2818 = vpop.f32.mrf.mxu0
    %v2819 = vpop.f32.mrf.mxu0
    %2820 = vdwg.mxu0
    %2821 = vmatprep.subr.bf16.mxu0 %v2699
    %2822 = vmatpush1.bf16.msra.mxu0 %v2698
    %2823 = vmatprep.subr.bf16.mxu0 %v2697
    %2824 = vmatpush1.bf16.msra.mxu0 %v2696
    %2825 = vmatprep.subr.bf16.mxu0 %v2695
    %2826 = vmatpush1.bf16.msra.mxu0 %v2694
    %2827 = vmatprep.subr.bf16.mxu0 %v2693
    %2828 = vmatpush1.bf16.msra.mxu0 %v2692
    %2829 = vmatprep.subr.bf16.mxu0 %v2691
    %2830 = vmatpush1.bf16.msra.mxu0 %v2690
    %2831 = vmatprep.subr.bf16.mxu0 %v2689
    %2832 = vmatpush1.bf16.msra.mxu0 %v2688
    %2833 = vmatprep.subr.bf16.mxu0 %v2687
    %2834 = vmatpush1.bf16.msra.mxu0 %v2686
    %2835 = vmatprep.subr.bf16.mxu0 %v2685
    %2836 = vmatpush1.bf16.msra.mxu0 %v2684
    %2837 = vmatprep.subr.bf16.mxu0 %v2715
    %2838 = vmatpush2.bf16.msra.mxu0 %v2714
    %2839 = vmatprep.subr.bf16.mxu0 %v2713
    %2840 = vmatpush2.bf16.msra.mxu0 %v2712
    %2841 = vmatprep.subr.bf16.mxu0 %v2711
    %2842 = vmatpush2.bf16.msra.mxu0 %v2710
    %2843 = vmatprep.subr.bf16.mxu0 %v2709
    %2844 = vmatpush2.bf16.msra.mxu0 %v2708
    %2845 = vmatprep.subr.bf16.mxu0 %v2707
    %2846 = vmatpush2.bf16.msra.mxu0 %v2706
    %2847 = vmatprep.subr.bf16.mxu0 %v2705
    %2848 = vmatpush2.bf16.msra.mxu0 %v2704
    %2849 = vmatprep.subr.bf16.mxu0 %v2703
    %2850 = vmatpush2.bf16.msra.mxu0 %v2702
    %2851 = vmatprep.subr.bf16.mxu0 %v2701
    %2852 = vmatpush2.bf16.msra.mxu0 %v2700
    %2853 = vmatprep.mubr.bf16.mxu0 %v2395
    %2854 = vmatmul.mubr.bf16.gmra.mxu0 %v2394
    %v2855 = vpop.f32.mrf.mxu0
    %v2856 = vadd.f32 %v2815, %v2855
    %v2857 = vpop.f32.mrf.mxu0
    %v2858 = vadd.f32 %v2817, %v2857
    %v2859 = vpop.f32.mrf.mxu0
    %v2860 = vpop.f32.mrf.mxu0
    %2861 = vdwg.mxu0
    %v2862 = vpack.c.bf16 %v2856, %v2856
    %v2863 = vpack.c.bf16 %v2858, %v2858
    %v2864 = vld [vmem:[%s6] sm:$0x3]
    %v2867 = vunpack.c.l.s4 1966171168
    %v2868 = vunpack.c.0.s8 %v2867
    %v2869 = vlaneseq
    %v2870 = vshrl.u32 %v2869, 7
    %v2871 = vsub.s32 %v2868, %v2870
    %v2872 = vrot.slane %v2864, %v2871
    %v2873 = vcombine.high %v2872, %v2872
    %v2875 = vunpack.c.l.s4 1966171168
    %v2876 = vunpack.c.0.s8 %v2875
    %v2877 = vlaneseq
    %v2878 = vshrl.u32 %v2877, 7
    %v2879 = vsub.s32 %v2876, %v2878
    %v2880 = vrot.slane %v2872, %v2879
    %v2882 = vunpack.c.l.s4 1966171168
    %v2883 = vunpack.c.0.s8 %v2882
    %v2884 = vlaneseq
    %v2885 = vshrl.u32 %v2884, 7
    %v2886 = vsub.s32 %v2883, %v2885
    %v2887 = vrot.slane %v2873, %v2886
    %v2889 = vpack.i.b16 %v2880, %v2880
    %v2891 = vlaneseq
    %v2892 = vshrl.u32 %v2891, 7
    %v2893 = vsub.s32 0, %v2892
    %v2894 = vrot.slane %v2889, %v2893
    %v2896 = vpack.i.b16 %v2887, %v2887
    %v2898 = vlaneseq
    %v2899 = vshrl.u32 %v2898, 7
    %v2900 = vsub.s32 0, %v2899
    %v2901 = vrot.slane %v2896, %v2900
    %v2902 = vadd.bf16 %v2862, %v2894
    %v2903 = vadd.bf16 %v2863, %v2901
    %v2904 = vmax.bf16 %v2902, 0
    %v2905 = vmax.bf16 %v2903, 0
    %v2906 = vld [vmem:[%s7] sm:$0xf]
    %v2907 = vld [vmem:[%s7 + $0x4] sm:$0xf]
    %v2908 = vld [vmem:[%s7 + $0x8] sm:$0xf]
    %v2909 = vld [vmem:[%s7 + $0xc] sm:$0xf]
    %v2910 = vld [vmem:[%s7 + $0x10] sm:$0xf]
    %v2911 = vld [vmem:[%s7 + $0x14] sm:$0xf]
    %v2912 = vld [vmem:[%s7 + $0x18] sm:$0xf]
    %v2913 = vld [vmem:[%s7 + $0x1c] sm:$0xf]
    %v2914 = vld [vmem:[%s7 + $0x20] sm:$0xf]
    %v2915 = vld [vmem:[%s7 + $0x24] sm:$0xf]
    %v2916 = vld [vmem:[%s7 + $0x28] sm:$0xf]
    %v2917 = vld [vmem:[%s7 + $0x2c] sm:$0xf]
    %v2918 = vld [vmem:[%s7 + $0x30] sm:$0xf]
    %v2919 = vld [vmem:[%s7 + $0x34] sm:$0xf]
    %v2920 = vld [vmem:[%s7 + $0x38] sm:$0xf]
    %v2921 = vld [vmem:[%s7 + $0x3c] sm:$0xf]
    %v2922 = vld [vmem:[%s7 + $0x40] sm:$0xf]
    %v2923 = vld [vmem:[%s7 + $0x44] sm:$0xf]
    %v2924 = vld [vmem:[%s7 + $0x48] sm:$0xf]
    %v2925 = vld [vmem:[%s7 + $0x4c] sm:$0xf]
    %v2926 = vld [vmem:[%s7 + $0x50] sm:$0xf]
    %v2927 = vld [vmem:[%s7 + $0x54] sm:$0xf]
    %v2928 = vld [vmem:[%s7 + $0x58] sm:$0xf]
    %v2929 = vld [vmem:[%s7 + $0x5c] sm:$0xf]
    %v2930 = vld [vmem:[%s7 + $0x60] sm:$0xf]
    %v2931 = vld [vmem:[%s7 + $0x64] sm:$0xf]
    %v2932 = vld [vmem:[%s7 + $0x68] sm:$0xf]
    %v2933 = vld [vmem:[%s7 + $0x6c] sm:$0xf]
    %v2934 = vld [vmem:[%s7 + $0x70] sm:$0xf]
    %v2935 = vld [vmem:[%s7 + $0x74] sm:$0xf]
    %v2936 = vld [vmem:[%s7 + $0x78] sm:$0xf]
    %v2937 = vld [vmem:[%s7 + $0x7c] sm:$0xf]
    %v2970 = vunpack.c.l.b16 %v2906
    %v2971 = vunpack.c.l.b16 %v2907
    %v2972 = vunpack.c.l.b16 %v2908
    %v2973 = vunpack.c.l.b16 %v2909
    %v2974 = vunpack.c.l.b16 %v2910
    %v2975 = vunpack.c.l.b16 %v2911
    %v2976 = vunpack.c.l.b16 %v2912
    %v2977 = vunpack.c.l.b16 %v2913
    %v2978 = vunpack.c.l.b16 %v2914
    %v2979 = vunpack.c.l.b16 %v2915
    %v2980 = vunpack.c.l.b16 %v2916
    %v2981 = vunpack.c.l.b16 %v2917
    %v2982 = vunpack.c.l.b16 %v2918
    %v2983 = vunpack.c.l.b16 %v2919
    %v2984 = vunpack.c.l.b16 %v2920
    %v2985 = vunpack.c.l.b16 %v2921
    %v2986 = vunpack.c.l.b16 %v2922
    %v2987 = vunpack.c.l.b16 %v2923
    %v2988 = vunpack.c.l.b16 %v2924
    %v2989 = vunpack.c.l.b16 %v2925
    %v2990 = vunpack.c.l.b16 %v2926
    %v2991 = vunpack.c.l.b16 %v2927
    %v2992 = vunpack.c.l.b16 %v2928
    %v2993 = vunpack.c.l.b16 %v2929
    %v2994 = vunpack.c.l.b16 %v2930
    %v2995 = vunpack.c.l.b16 %v2931
    %v2996 = vunpack.c.l.b16 %v2932
    %v2997 = vunpack.c.l.b16 %v2933
    %v2998 = vunpack.c.l.b16 %v2934
    %v2999 = vunpack.c.l.b16 %v2935
    %v3000 = vunpack.c.l.b16 %v2936
    %v3001 = vunpack.c.l.b16 %v2937
    %v3002 = vpack.c.b16 %v2971, %v2970
    %v3003 = vpack.c.b16 %v2973, %v2972
    %v3004 = vpack.c.b16 %v2975, %v2974
    %v3005 = vpack.c.b16 %v2977, %v2976
    %v3006 = vpack.c.b16 %v2979, %v2978
    %v3007 = vpack.c.b16 %v2981, %v2980
    %v3008 = vpack.c.b16 %v2983, %v2982
    %v3009 = vpack.c.b16 %v2985, %v2984
    %v3010 = vpack.c.b16 %v2987, %v2986
    %v3011 = vpack.c.b16 %v2989, %v2988
    %v3012 = vpack.c.b16 %v2991, %v2990
    %v3013 = vpack.c.b16 %v2993, %v2992
    %v3014 = vpack.c.b16 %v2995, %v2994
    %v3015 = vpack.c.b16 %v2997, %v2996
    %v3016 = vpack.c.b16 %v2999, %v2998
    %v3017 = vpack.c.b16 %v3001, %v3000
    %3034 = vmatprep.subr.bf16.mxu0 0
    %3035 = vmatpush1.bf16.msra.mxu0 %v3009
    %3036 = vmatprep.subr.bf16.mxu0 0
    %3037 = vmatpush1.bf16.msra.mxu0 %v3008
    %3038 = vmatprep.subr.bf16.mxu0 0
    %3039 = vmatpush1.bf16.msra.mxu0 %v3007
    %3040 = vmatprep.subr.bf16.mxu0 0
    %3041 = vmatpush1.bf16.msra.mxu0 %v3006
    %3042 = vmatprep.subr.bf16.mxu0 0
    %3043 = vmatpush1.bf16.msra.mxu0 %v3005
    %3044 = vmatprep.subr.bf16.mxu0 0
    %3045 = vmatpush1.bf16.msra.mxu0 %v3004
    %3046 = vmatprep.subr.bf16.mxu0 0
    %3047 = vmatpush1.bf16.msra.mxu0 %v3003
    %3048 = vmatprep.subr.bf16.mxu0 0
    %3049 = vmatpush1.bf16.msra.mxu0 %v3002
    %3050 = vmatprep.subr.bf16.mxu0 0
    %3051 = vmatpush2.bf16.msra.mxu0 %v3017
    %3052 = vmatprep.subr.bf16.mxu0 0
    %3053 = vmatpush2.bf16.msra.mxu0 %v3016
    %3054 = vmatprep.subr.bf16.mxu0 0
    %3055 = vmatpush2.bf16.msra.mxu0 %v3015
    %3056 = vmatprep.subr.bf16.mxu0 0
    %3057 = vmatpush2.bf16.msra.mxu0 %v3014
    %3058 = vmatprep.subr.bf16.mxu0 0
    %3059 = vmatpush2.bf16.msra.mxu0 %v3013
    %3060 = vmatprep.subr.bf16.mxu0 0
    %3061 = vmatpush2.bf16.msra.mxu0 %v3012
    %3062 = vmatprep.subr.bf16.mxu0 0
    %3063 = vmatpush2.bf16.msra.mxu0 %v3011
    %3064 = vmatprep.subr.bf16.mxu0 0
    %3065 = vmatpush2.bf16.msra.mxu0 %v3010
    %3066 = vmatprep.mubr.bf16.mxu0 %v2905
    %3067 = vmatmul.mubr.bf16.gmra.mxu0 %v2904
    %v3068 = vpop.f32.mrf.mxu0
    %v3069 = vadd.f32 0.0, %v3068
    %v3070 = vpop.f32.mrf.mxu0
    %v3071 = vpop.f32.mrf.mxu0
    %v3072 = vpop.f32.mrf.mxu0
    %3073 = vdwg.mxu0
    %v3074 = vpack.c.bf16 %v3069, %v3069
    %v3075 = vld [vmem:[%s8] sm:$0x1]
    %v3077 = vpack.i.b16 %v3075, %v3075
    %v3079 = vlaneseq
    %v3080 = vshrl.u32 %v3079, 7
    %v3081 = vsub.s32 0, %v3080
    %v3082 = vrot.slane %v3077, %v3081
    %v3083 = vadd.bf16 %v3074, %v3082
    %v3084 = vmax.bf16 %v3083, 0
    %v3085 = vld [vmem:[%s9] sm:$0x1]
    %v3086 = vunpack.c.l.bf16 %v3085
    %v3087 = vunpack.c.l.bf16 %v3084
    %v3088 = vlaneseq
    %v3089 = vshrl.u32 %v3088, 7
    %v3090 = vsub.s32 0, %v3089
    %v3091 = vrot.slane %v3086, %v3090
    %v3092 = vmul.f32 %v3087, %v3091
    %vm3093 = vcmask 523264
    %v3094 = vsel %vm3093, %v3092, 0.0
    %3095 = vadd.xlane.f32.xlu0 %v3094
    %v3096 = vpop.xlane.xlu0 %3095
    %v3097 = vld [vmem:[#allocation2] sm:$0x1]
    %v3098 = vunpack.c.l.bf16 %v3097
    %v3099 = vlaneseq
    %v3100 = vshrl.u32 %v3099, 7
    %v3101 = vsub.s32 0, %v3100
    %v3102 = vrot.slane %v3098, %v3101
    %v3103 = vadd.f32 %v3096, %v3102
    %vm3104 = vcmask 7168
    %3105 = vst.msk [vmem:[%s11] sm:$0xff] %vm3104, %v3103
    // Predicated region
    $region54: #{logistic_map_nn_forward.1} parent=1 // pred_check
      _
    $region55: #{logistic_map_nn_forward.1} parent=1 // pred_check_branch
      %3107 = sbr.rel (0) target = $region57
    $region56: #{logistic_map_nn_forward.1} parent=1 // pred_region
      _
    $region57: #{logistic_map_nn_forward.1} parent=1 // pred_fallthru
      _
    // Predicated region
    $region58: #{logistic_map_nn_forward.1} parent=1 // pred_check
      _
    $region59: #{logistic_map_nn_forward.1} parent=1 // pred_check_branch
      %3109 = sbr.rel (0) target = $region61
    $region60: #{logistic_map_nn_forward.1} parent=1 // pred_region
      _
    $region61: #{logistic_map_nn_forward.1} parent=1 // pred_fallthru
      _
    %3110 = vsyncpa [#allocation4], 1
    %3111 = vsyncpa [#allocation6], 1

</llo_original>
